<compile_context>
chip_gen: v7x
topology: tpu7x:2x2x1
jax: 0.10.0
libtpu: 0.0.40
codegen_flags: <defaults>
</compile_context>

<pallas_src>
import functools

import jax
import jax.numpy as jnp
from jax.experimental import pallas as pl
from jax.experimental.pallas import tpu as pltpu


# --------------------------------------------------------------------------- #
# Kernel
# --------------------------------------------------------------------------- #
def _cvae_hybrid_kernel(
    # batch-tiled inputs
    xy_ref, eps_ref,
    # fused weights (resident, untiled)
    w_enc_ref, be1_ref,
    w_mulv_ref, b_mulv_ref,
    wd_zy_ref, bd1_ref, wd_out_ref, bd_out_ref,
    wf1p_ref, bf1p_ref, wf2_ref, bf2_ref,
    # packed, lane-dense output slab: [x_pred | mu | logvar | x_hat | y_pred | 0-pad]
    out_ref,
    *, tb, Dx, Dy, Z, pad,
):
    f32 = jnp.float32
    relu = lambda a: jnp.maximum(a, 0.0)

    xy = xy_ref[...]          # (tb, Dx+Dy)  host-side fused [x|y]
    y = xy[:, Dx:]            # (tb, Dy)     condition, sliced (no separate input DMA)
    eps = eps_ref[...]        # (tb, Z)

    # ---- encoder: single fused matmul on the concatenated input -----------
    h1 = relu(jnp.dot(xy, w_enc_ref[...], preferred_element_type=f32) + be1_ref[...])

    # ---- fused mu/logvar head ---------------------------------------------
    mulv = jnp.dot(h1, w_mulv_ref[...], preferred_element_type=f32) + b_mulv_ref[...]
    mu = mulv[:, :Z]
    logvar = mulv[:, Z:]

    # ---- reparameterization (f32 elementwise; exp runs on the EUP) --------
    z = mu + jnp.exp(0.5 * logvar) * eps

    # ---- decoder, both latents in one pass, conditioning folded in --------
    lat_aug = jnp.concatenate(
        [jnp.concatenate([z, y], axis=1),        # rows [0, tb)   -> x_hat
         jnp.concatenate([mu, y], axis=1)],      # rows [tb, 2tb) -> x_pred
        axis=0)                                  # (2tb, Z+Dy)
    h2 = relu(jnp.dot(lat_aug, wd_zy_ref[...], preferred_element_type=f32)
              + bd1_ref[...])                                        # (2tb, H)
    dec = jnp.dot(h2, wd_out_ref[...], preferred_element_type=f32) + bd_out_ref[...]
    x_hat = dec[:tb]          # reconstruction from sampled latent z
    x_pred = dec[tb:]         # deterministic prediction from mu

    # ---- forward_model(x_pred, None), first layer affinely pre-fused ------
    # relu(x_pred @ Wf1 + bf1) == relu(h2_mu @ (Wd_out@Wf1) + (bd_out@Wf1 + bf1))
    hf = relu(jnp.dot(h2[tb:], wf1p_ref[...], preferred_element_type=f32)
              + bf1p_ref[...])
    y_pred = jnp.dot(hf, wf2_ref[...], preferred_element_type=f32) + bf2_ref[...]

    # ---- one unmasked, lane-dense (tb, 128k) store -------------------------
    pieces = [x_pred, mu, logvar, x_hat, y_pred]
    if pad > 0:
        pieces.append(jnp.zeros((tb, pad), f32))
    out_ref[...] = jnp.concatenate(pieces, axis=1)


# --------------------------------------------------------------------------- #
# Host-side parameter fusion (run ONCE at init, not per forward call)
# --------------------------------------------------------------------------- #
def prepare_params(p):
    w_enc = jnp.concatenate([p["we_x"], p["we_y"]], axis=0)     # (Dx+Dy, H)
    w_mulv = jnp.concatenate([p["wmu"], p["wlv"]], axis=1)      # (H, 2Z)
    b_mulv = jnp.concatenate([p["bmu"], p["blv"]], axis=1)      # (1, 2Z)
    wd_zy = jnp.concatenate([p["wd_z"], p["wd_y"]], axis=0)     # (Z+Dy, H)
    wf1p = p["wd_out"] @ p["wf1"]                               # (H, H)
    bf1p = p["bd_out"] @ p["wf1"] + p["bf1"]                    # (1, H)
    return {
        "w_enc": w_enc, "be1": p["be1"],
        "w_mulv": w_mulv, "b_mulv": b_mulv,
        "wd_zy": wd_zy, "bd1": p["bd1"],
        "wd_out": p["wd_out"], "bd_out": p["bd_out"],
        "wf1p": wf1p, "bf1p": bf1p,
        "wf2": p["wf2"], "bf2": p["bf2"],
    }


# --------------------------------------------------------------------------- #
# Wrapper
# --------------------------------------------------------------------------- #
def cvae_hybrid_forward(x, y, eps, fused, *, block_b=None):
    """Fused cVAE_hybrid forward pass, batch tiled over a parallel grid axis."""
    B, Dx = x.shape
    _, Dy = y.shape
    _, Z = eps.shape

    # Batch tile: keep the whole batch in one tile while it fits (rows stay
    # dense on the MXU); tile only genuinely large batches.
    if block_b is None:
        if B <= 256:
            block_b = B
        else:
            block_b = B
            for cand in (256, 128, 64, 32, 16, 8):
                if B % cand == 0:
                    block_b = cand
                    break
    assert B % block_b == 0, "batch must be divisible by the batch tile"
    assert block_b == B or block_b % 8 == 0, "partial batch tile must be a multiple of 8"

    xy = jnp.concatenate([x, y], axis=1)                        # (B, Dx+Dy)

    # Lane-dense padded output slab width (multiple of 128).
    n_raw = 2 * Dx + 2 * Z + Dy
    n_out = max(128, ((n_raw + 127) // 128) * 128)
    pad = n_out - n_raw

    inputs = (
        xy, eps,
        fused["w_enc"], fused["be1"],
        fused["w_mulv"], fused["b_mulv"],
        fused["wd_zy"], fused["bd1"], fused["wd_out"], fused["bd_out"],
        fused["wf1p"], fused["bf1p"], fused["wf2"], fused["bf2"],
    )

    def batched_spec(last):
        return pl.BlockSpec((block_b, last), lambda i: (i, 0))

    def full_spec(shape):
        nd = len(shape)
        return pl.BlockSpec(shape, lambda i, _nd=nd: (0,) * _nd)

    in_specs = [batched_spec(Dx + Dy), batched_spec(Z)]
    in_specs += [full_spec(a.shape) for a in inputs[2:]]

    kernel = functools.partial(
        _cvae_hybrid_kernel, tb=block_b, Dx=Dx, Dy=Dy, Z=Z, pad=pad)

    out = pl.pallas_call(
        kernel,
        out_shape=jax.ShapeDtypeStruct((B, n_out), jnp.float32),
        grid=(B // block_b,),
        in_specs=in_specs,
        out_specs=pl.BlockSpec((block_b, n_out), lambda i: (i, 0)),
        compiler_params=pltpu.CompilerParams(
            # Batch tiles are independent -> shard across TensorCores (v7x).
            dimension_semantics=("parallel",),
            # Explicit scoped-VMEM budget; safe on v5e/v6e/v7x at these sizes.
            vmem_limit_bytes=32 * 1024 * 1024,
        ),
    )(*inputs)

    # Split the packed slab back into the five PyTorch outputs.
    x_pred = out[:, 0:Dx]
    mu = out[:, Dx:Dx + Z]
    logvar = out[:, Dx + Z:Dx + 2 * Z]
    x_hat = out[:, Dx + 2 * Z:2 * Dx + 2 * Z]
    y_pred = out[:, 2 * Dx + 2 * Z:2 * Dx + 2 * Z + Dy]
    return x_pred, mu, logvar, x_hat, y_pred


# --------------------------------------------------------------------------- #
# Synthetic (unfused) parameters + pure-JAX reference mirroring PyTorch
# --------------------------------------------------------------------------- #
def init_params(key, Dx, Dy, H, Z):
    keys = jax.random.split(key, 16)

    def w(k, shape):
        fan_in = shape[0]
        return jax.random.normal(k, shape, jnp.float32) / jnp.sqrt(jnp.float32(fan_in))

    return {
        # encoder
        "we_x": w(keys[0], (Dx, H)),
        "we_y": w(keys[1], (Dy, H)),
        "be1": jnp.zeros((1, H), jnp.float32),
        "wmu": w(keys[2], (H, Z)),
        "bmu": jnp.zeros((1, Z), jnp.float32),
        "wlv": w(keys[3], (H, Z)),
        "blv": jnp.zeros((1, Z), jnp.float32),
        # decoder
        "wd_z": w(keys[4], (Z, H)),
        "wd_y": w(keys[5], (Dy, H)),
        "bd1": jnp.zeros((1, H), jnp.float32),
        "wd_out": w(keys[6], (H, Dx)),
        "bd_out": jnp.zeros((1, Dx), jnp.float32),
        # forward model
        "wf1": w(keys[7], (Dx, H)),
        "bf1": jnp.zeros((1, H), jnp.float32),
        "wf2": w(keys[8], (H, Dy)),
        "bf2": jnp.zeros((1, Dy), jnp.float32),
    }


def _reference_forward(x, y, eps, p):
    """Pure-JAX reference mirroring the original unfused PyTorch computation."""
    relu = lambda a: jnp.maximum(a, 0.0)
    h1 = relu(x @ p["we_x"] + y @ p["we_y"] + p["be1"])
    mu = h1 @ p["wmu"] + p["bmu"]
    logvar = h1 @ p["wlv"] + p["blv"]
    z = mu + jnp.exp(0.5 * logvar) * eps

    def decode(latent):
        h2 = relu(latent @ p["wd_z"] + y @ p["wd_y"] + p["bd1"])
        return h2 @ p["wd_out"] + p["bd_out"]

    x_hat = decode(z)
    x_pred = decode(mu)
    hf = relu(x_pred @ p["wf1"] + p["bf1"])
    y_pred = hf @ p["wf2"] + p["bf2"]
    return x_pred, mu, logvar, x_hat, y_pred


# --------------------------------------------------------------------------- #
if __name__ == "__main__":
    B, Dx, Dy, H, Z = 128, 32, 16, 64, 8

    key = jax.random.PRNGKey(0)
    k_x, k_y, k_eps, k_p = jax.random.split(key, 4)

    x = jax.random.normal(k_x, (B, Dx), jnp.float32)     # target design
    y = jax.random.normal(k_y, (B, Dy), jnp.float32)     # condition / response
    eps = jax.random.normal(k_eps, (B, Z), jnp.float32)  # reparameterization noise

    params = init_params(k_p, Dx, Dy, H, Z)
    fused = prepare_params(params)                        # host-side fusion, once

    fwd = jax.jit(cvae_hybrid_forward, static_argnames=("block_b",))

    refs = _reference_forward(x, y, eps, params)

    # (1) single-tile batch (grid=(1,)), (2) tiled batch grid (grid=(2,)).
    for bb in (None, 64):
        outs = fwd(x, y, eps, fused, block_b=bb)
        outs = jax.block_until_ready(outs)
        for o, r in zip(outs, refs):
            assert o.shape == r.shape
            # Affine fusion of Wd_out@Wf1 changes rounding slightly vs the
            # unfused reference, hence the modest tolerance.
            assert jnp.allclose(o, r, atol=1e-3, rtol=1e-3), "mismatch vs reference"

    print("KERNEL_OK")
</pallas_src>

<mosaic_0001>
module attributes {stable_mosaic.version = 11 : i64} {
  func.func @_cvae_hybrid_kernel(%arg0: i32, %arg1: memref<128x48xf32, #tpu.memory_space<vmem>>, %arg2: memref<128x8xf32, #tpu.memory_space<vmem>>, %arg3: memref<48x64xf32, #tpu.memory_space<vmem>>, %arg4: memref<1x64xf32, #tpu.memory_space<vmem>>, %arg5: memref<64x16xf32, #tpu.memory_space<vmem>>, %arg6: memref<1x16xf32, #tpu.memory_space<vmem>>, %arg7: memref<24x64xf32, #tpu.memory_space<vmem>>, %arg8: memref<1x64xf32, #tpu.memory_space<vmem>>, %arg9: memref<64x32xf32, #tpu.memory_space<vmem>>, %arg10: memref<1x32xf32, #tpu.memory_space<vmem>>, %arg11: memref<64x64xf32, #tpu.memory_space<vmem>>, %arg12: memref<1x64xf32, #tpu.memory_space<vmem>>, %arg13: memref<64x16xf32, #tpu.memory_space<vmem>>, %arg14: memref<1x16xf32, #tpu.memory_space<vmem>>, %arg15: memref<128x128xf32, #tpu.memory_space<vmem>>) attributes {dimension_semantics = [#tpu.dimension_semantics<parallel>], iteration_bounds = array<i64: 1>, scalar_prefetch = 0 : i64, scratch_operands = 0 : i64, tpu.core_type = #tpu.core_type<tc>, window_params = [{transform_indices = @transform_0, window_bounds = array<i64: 128, 48>}, {transform_indices = @transform_1, window_bounds = array<i64: 128, 8>}, {pipeline_mode = #tpu.pipeline_mode<synchronous>, transform_indices = @transform_2, window_bounds = array<i64: 48, 64>}, {pipeline_mode = #tpu.pipeline_mode<synchronous>, transform_indices = @transform_3, window_bounds = array<i64: 1, 64>}, {pipeline_mode = #tpu.pipeline_mode<synchronous>, transform_indices = @transform_4, window_bounds = array<i64: 64, 16>}, {pipeline_mode = #tpu.pipeline_mode<synchronous>, transform_indices = @transform_5, window_bounds = array<i64: 1, 16>}, {pipeline_mode = #tpu.pipeline_mode<synchronous>, transform_indices = @transform_6, window_bounds = array<i64: 24, 64>}, {pipeline_mode = #tpu.pipeline_mode<synchronous>, transform_indices = @transform_7, window_bounds = array<i64: 1, 64>}, {pipeline_mode = #tpu.pipeline_mode<synchronous>, transform_indices = @transform_8, window_bounds = array<i64: 64, 32>}, {pipeline_mode = #tpu.pipeline_mode<synchronous>, transform_indices = @transform_9, window_bounds = array<i64: 1, 32>}, {pipeline_mode = #tpu.pipeline_mode<synchronous>, transform_indices = @transform_10, window_bounds = array<i64: 64, 64>}, {pipeline_mode = #tpu.pipeline_mode<synchronous>, transform_indices = @transform_11, window_bounds = array<i64: 1, 64>}, {pipeline_mode = #tpu.pipeline_mode<synchronous>, transform_indices = @transform_12, window_bounds = array<i64: 64, 16>}, {pipeline_mode = #tpu.pipeline_mode<synchronous>, transform_indices = @transform_13, window_bounds = array<i64: 1, 16>}, {transform_indices = @transform_14, window_bounds = array<i64: 128, 128>}]} {
    %c0 = arith.constant 0 : index
    %c0_0 = arith.constant 0 : index
    %0 = vector.load %arg1[%c0, %c0_0] : memref<128x48xf32, #tpu.memory_space<vmem>>, vector<128x48xf32>
    %1 = vector.extract_strided_slice %0 {offsets = [0, 32], sizes = [128, 16], strides = [1, 1]} : vector<128x48xf32> to vector<128x16xf32>
    %c0_1 = arith.constant 0 : index
    %c0_2 = arith.constant 0 : index
    %2 = vector.load %arg2[%c0_1, %c0_2] : memref<128x8xf32, #tpu.memory_space<vmem>>, vector<128x8xf32>
    %c0_3 = arith.constant 0 : index
    %c0_4 = arith.constant 0 : index
    %3 = vector.load %arg3[%c0_3, %c0_4] : memref<48x64xf32, #tpu.memory_space<vmem>>, vector<48x64xf32>
    %cst = arith.constant dense<0.000000e+00> : vector<128x64xf32>
    %4 = tpu.matmul %0, %3, %cst {dimension_numbers = #tpu.dot_dimension_numbers<[1], [0], [0], [1], [0, 0, 1, 1], [], []>} : vector<128x48xf32>, vector<48x64xf32>, vector<128x64xf32> -> vector<128x64xf32>
    %c0_5 = arith.constant 0 : index
    %c0_6 = arith.constant 0 : index
    %5 = vector.load %arg4[%c0_5, %c0_6] : memref<1x64xf32, #tpu.memory_space<vmem>>, vector<1x64xf32>
    %6 = vector.broadcast %5 : vector<1x64xf32> to vector<128x64xf32>
    %7 = arith.addf %4, %6 : vector<128x64xf32>
    %cst_7 = arith.constant 0.000000e+00 : f32
    %8 = vector.broadcast %cst_7 : f32 to vector<128x64xf32>
    %9 = arith.maximumf %7, %8 : vector<128x64xf32>
    %c0_8 = arith.constant 0 : index
    %c0_9 = arith.constant 0 : index
    %10 = vector.load %arg5[%c0_8, %c0_9] : memref<64x16xf32, #tpu.memory_space<vmem>>, vector<64x16xf32>
    %cst_10 = arith.constant dense<0.000000e+00> : vector<128x16xf32>
    %11 = tpu.matmul %9, %10, %cst_10 {dimension_numbers = #tpu.dot_dimension_numbers<[1], [0], [0], [1], [0, 0, 1, 1], [], []>} : vector<128x64xf32>, vector<64x16xf32>, vector<128x16xf32> -> vector<128x16xf32>
    %c0_11 = arith.constant 0 : index
    %c0_12 = arith.constant 0 : index
    %12 = vector.load %arg6[%c0_11, %c0_12] : memref<1x16xf32, #tpu.memory_space<vmem>>, vector<1x16xf32>
    %13 = vector.broadcast %12 : vector<1x16xf32> to vector<128x16xf32>
    %14 = arith.addf %11, %13 : vector<128x16xf32>
    %15 = vector.extract_strided_slice %14 {offsets = [0, 0], sizes = [128, 8], strides = [1, 1]} : vector<128x16xf32> to vector<128x8xf32>
    %16 = vector.extract_strided_slice %14 {offsets = [0, 8], sizes = [128, 8], strides = [1, 1]} : vector<128x16xf32> to vector<128x8xf32>
    %cst_13 = arith.constant 5.000000e-01 : f32
    %17 = vector.broadcast %cst_13 : f32 to vector<128x8xf32>
    %18 = arith.mulf %17, %16 : vector<128x8xf32>
    %19 = math.exp %18 : vector<128x8xf32>
    %20 = arith.mulf %19, %2 : vector<128x8xf32>
    %21 = arith.addf %15, %20 : vector<128x8xf32>
    %22 = tpu.concatenate %21, %1 in 1 : vector<128x8xf32>, vector<128x16xf32> -> vector<128x24xf32>
    %23 = tpu.concatenate %15, %1 in 1 : vector<128x8xf32>, vector<128x16xf32> -> vector<128x24xf32>
    %24 = tpu.concatenate %22, %23 in 0 : vector<128x24xf32>, vector<128x24xf32> -> vector<256x24xf32>
    %c0_14 = arith.constant 0 : index
    %c0_15 = arith.constant 0 : index
    %25 = vector.load %arg7[%c0_14, %c0_15] : memref<24x64xf32, #tpu.memory_space<vmem>>, vector<24x64xf32>
    %cst_16 = arith.constant dense<0.000000e+00> : vector<256x64xf32>
    %26 = tpu.matmul %24, %25, %cst_16 {dimension_numbers = #tpu.dot_dimension_numbers<[1], [0], [0], [1], [0, 0, 1, 1], [], []>} : vector<256x24xf32>, vector<24x64xf32>, vector<256x64xf32> -> vector<256x64xf32>
    %c0_17 = arith.constant 0 : index
    %c0_18 = arith.constant 0 : index
    %27 = vector.load %arg8[%c0_17, %c0_18] : memref<1x64xf32, #tpu.memory_space<vmem>>, vector<1x64xf32>
    %28 = vector.broadcast %27 : vector<1x64xf32> to vector<256x64xf32>
    %29 = arith.addf %26, %28 : vector<256x64xf32>
    %cst_19 = arith.constant 0.000000e+00 : f32
    %30 = vector.broadcast %cst_19 : f32 to vector<256x64xf32>
    %31 = arith.maximumf %29, %30 : vector<256x64xf32>
    %c0_20 = arith.constant 0 : index
    %c0_21 = arith.constant 0 : index
    %32 = vector.load %arg9[%c0_20, %c0_21] : memref<64x32xf32, #tpu.memory_space<vmem>>, vector<64x32xf32>
    %cst_22 = arith.constant dense<0.000000e+00> : vector<256x32xf32>
    %33 = tpu.matmul %31, %32, %cst_22 {dimension_numbers = #tpu.dot_dimension_numbers<[1], [0], [0], [1], [0, 0, 1, 1], [], []>} : vector<256x64xf32>, vector<64x32xf32>, vector<256x32xf32> -> vector<256x32xf32>
    %c0_23 = arith.constant 0 : index
    %c0_24 = arith.constant 0 : index
    %34 = vector.load %arg10[%c0_23, %c0_24] : memref<1x32xf32, #tpu.memory_space<vmem>>, vector<1x32xf32>
    %35 = vector.broadcast %34 : vector<1x32xf32> to vector<256x32xf32>
    %36 = arith.addf %33, %35 : vector<256x32xf32>
    %37 = vector.extract_strided_slice %36 {offsets = [0, 0], sizes = [128, 32], strides = [1, 1]} : vector<256x32xf32> to vector<128x32xf32>
    %38 = vector.extract_strided_slice %36 {offsets = [128, 0], sizes = [128, 32], strides = [1, 1]} : vector<256x32xf32> to vector<128x32xf32>
    %39 = vector.extract_strided_slice %31 {offsets = [128, 0], sizes = [128, 64], strides = [1, 1]} : vector<256x64xf32> to vector<128x64xf32>
    %c0_25 = arith.constant 0 : index
    %c0_26 = arith.constant 0 : index
    %40 = vector.load %arg11[%c0_25, %c0_26] : memref<64x64xf32, #tpu.memory_space<vmem>>, vector<64x64xf32>
    %cst_27 = arith.constant dense<0.000000e+00> : vector<128x64xf32>
    %41 = tpu.matmul %39, %40, %cst_27 {dimension_numbers = #tpu.dot_dimension_numbers<[1], [0], [0], [1], [0, 0, 1, 1], [], []>} : vector<128x64xf32>, vector<64x64xf32>, vector<128x64xf32> -> vector<128x64xf32>
    %c0_28 = arith.constant 0 : index
    %c0_29 = arith.constant 0 : index
    %42 = vector.load %arg12[%c0_28, %c0_29] : memref<1x64xf32, #tpu.memory_space<vmem>>, vector<1x64xf32>
    %43 = vector.broadcast %42 : vector<1x64xf32> to vector<128x64xf32>
    %44 = arith.addf %41, %43 : vector<128x64xf32>
    %cst_30 = arith.constant 0.000000e+00 : f32
    %45 = vector.broadcast %cst_30 : f32 to vector<128x64xf32>
    %46 = arith.maximumf %44, %45 : vector<128x64xf32>
    %c0_31 = arith.constant 0 : index
    %c0_32 = arith.constant 0 : index
    %47 = vector.load %arg13[%c0_31, %c0_32] : memref<64x16xf32, #tpu.memory_space<vmem>>, vector<64x16xf32>
    %cst_33 = arith.constant dense<0.000000e+00> : vector<128x16xf32>
    %48 = tpu.matmul %46, %47, %cst_33 {dimension_numbers = #tpu.dot_dimension_numbers<[1], [0], [0], [1], [0, 0, 1, 1], [], []>} : vector<128x64xf32>, vector<64x16xf32>, vector<128x16xf32> -> vector<128x16xf32>
    %c0_34 = arith.constant 0 : index
    %c0_35 = arith.constant 0 : index
    %49 = vector.load %arg14[%c0_34, %c0_35] : memref<1x16xf32, #tpu.memory_space<vmem>>, vector<1x16xf32>
    %50 = vector.broadcast %49 : vector<1x16xf32> to vector<128x16xf32>
    %51 = arith.addf %48, %50 : vector<128x16xf32>
    %cst_36 = arith.constant 0.000000e+00 : f32
    %52 = vector.broadcast %cst_36 : f32 to vector<128x32xf32>
    %53 = tpu.concatenate %38, %15, %16, %37, %51, %52 in 1 : vector<128x32xf32>, vector<128x8xf32>, vector<128x8xf32>, vector<128x32xf32>, vector<128x16xf32>, vector<128x32xf32> -> vector<128x128xf32>
    %c0_37 = arith.constant 0 : index
    %c0_38 = arith.constant 0 : index
    %54 = vector.load %arg15[%c0_37, %c0_38] : memref<128x128xf32, #tpu.memory_space<vmem>>, vector<128x128xf32>
    tpu.vector_store %arg15[%c0_37, %c0_38], %53 {strides = array<i32>} : memref<128x128xf32, #tpu.memory_space<vmem>>, vector<128x128xf32>,
    return
  }
  func.func @transform_0(%arg0: i32) -> (i32, i32) {
    %c0_i32 = arith.constant 0 : i32
    %c0_i32_0 = arith.constant 0 : i32
    return %arg0, %c0_i32 : i32, i32
  }
  func.func @transform_1(%arg0: i32) -> (i32, i32) {
    %c0_i32 = arith.constant 0 : i32
    %c0_i32_0 = arith.constant 0 : i32
    return %arg0, %c0_i32 : i32, i32
  }
  func.func @transform_2(%arg0: i32) -> (i32, i32) {
    %c0_i32 = arith.constant 0 : i32
    %c0_i32_0 = arith.constant 0 : i32
    %c0_i32_1 = arith.constant 0 : i32
    return %c0_i32, %c0_i32_0 : i32, i32
  }
  func.func @transform_3(%arg0: i32) -> (i32, i32) {
    %c0_i32 = arith.constant 0 : i32
    %c0_i32_0 = arith.constant 0 : i32
    %c0_i32_1 = arith.constant 0 : i32
    return %c0_i32, %c0_i32_0 : i32, i32
  }
  func.func @transform_4(%arg0: i32) -> (i32, i32) {
    %c0_i32 = arith.constant 0 : i32
    %c0_i32_0 = arith.constant 0 : i32
    %c0_i32_1 = arith.constant 0 : i32
    return %c0_i32, %c0_i32_0 : i32, i32
  }
  func.func @transform_5(%arg0: i32) -> (i32, i32) {
    %c0_i32 = arith.constant 0 : i32
    %c0_i32_0 = arith.constant 0 : i32
    %c0_i32_1 = arith.constant 0 : i32
    return %c0_i32, %c0_i32_0 : i32, i32
  }
  func.func @transform_6(%arg0: i32) -> (i32, i32) {
    %c0_i32 = arith.constant 0 : i32
    %c0_i32_0 = arith.constant 0 : i32
    %c0_i32_1 = arith.constant 0 : i32
    return %c0_i32, %c0_i32_0 : i32, i32
  }
  func.func @transform_7(%arg0: i32) -> (i32, i32) {
    %c0_i32 = arith.constant 0 : i32
    %c0_i32_0 = arith.constant 0 : i32
    %c0_i32_1 = arith.constant 0 : i32
    return %c0_i32, %c0_i32_0 : i32, i32
  }
  func.func @transform_8(%arg0: i32) -> (i32, i32) {
    %c0_i32 = arith.constant 0 : i32
    %c0_i32_0 = arith.constant 0 : i32
    %c0_i32_1 = arith.constant 0 : i32
    return %c0_i32, %c0_i32_0 : i32, i32
  }
  func.func @transform_9(%arg0: i32) -> (i32, i32) {
    %c0_i32 = arith.constant 0 : i32
    %c0_i32_0 = arith.constant 0 : i32
    %c0_i32_1 = arith.constant 0 : i32
    return %c0_i32, %c0_i32_0 : i32, i32
  }
  func.func @transform_10(%arg0: i32) -> (i32, i32) {
    %c0_i32 = arith.constant 0 : i32
    %c0_i32_0 = arith.constant 0 : i32
    %c0_i32_1 = arith.constant 0 : i32
    return %c0_i32, %c0_i32_0 : i32, i32
  }
  func.func @transform_11(%arg0: i32) -> (i32, i32) {
    %c0_i32 = arith.constant 0 : i32
    %c0_i32_0 = arith.constant 0 : i32
    %c0_i32_1 = arith.constant 0 : i32
    return %c0_i32, %c0_i32_0 : i32, i32
  }
  func.func @transform_12(%arg0: i32) -> (i32, i32) {
    %c0_i32 = arith.constant 0 : i32
    %c0_i32_0 = arith.constant 0 : i32
    %c0_i32_1 = arith.constant 0 : i32
    return %c0_i32, %c0_i32_0 : i32, i32
  }
  func.func @transform_13(%arg0: i32) -> (i32, i32) {
    %c0_i32 = arith.constant 0 : i32
    %c0_i32_0 = arith.constant 0 : i32
    %c0_i32_1 = arith.constant 0 : i32
    return %c0_i32, %c0_i32_0 : i32, i32
  }
  func.func @transform_14(%arg0: i32) -> (i32, i32) {
    %c0_i32 = arith.constant 0 : i32
    %c0_i32_0 = arith.constant 0 : i32
    return %arg0, %c0_i32 : i32, i32
  }
}

</mosaic_0001>

<llo_original>
// kernel: cvae_hybrid_forward.1
$region0: #{cvae_hybrid_forward.1}
  #allocation0 [shape = 'u32[]', space=smem, size = 0x4, offset = 0x4, fixed_abs, tag = 'smem constant byte address 0x4 - core index']
  #allocation1 [shape = 'u32[144,128]{1,0:T(1,128)}', space=vmem, size = 0x12000, scoped, tag = 'internal scratch']
  %s0 = inlined_call_operand.vmem [shape: f32[128,48], index: 0, kind: input, shape index: {}]
  %s1 = inlined_call_operand.vmem [shape: f32[128,8], index: 1, kind: input, shape index: {}]
  %s2 = inlined_call_operand.vmem [shape: f32[48,64], index: 2, kind: input, shape index: {}]
  %s3 = inlined_call_operand.vmem [shape: f32[1,64], index: 3, kind: input, shape index: {}]
  %s4 = inlined_call_operand.vmem [shape: f32[64,16], index: 4, kind: input, shape index: {}]
  %s5 = inlined_call_operand.vmem [shape: f32[1,16], index: 5, kind: input, shape index: {}]
  %s6 = inlined_call_operand.vmem [shape: f32[24,64], index: 6, kind: input, shape index: {}]
  %s7 = inlined_call_operand.vmem [shape: f32[1,64], index: 7, kind: input, shape index: {}]
  %s8 = inlined_call_operand.vmem [shape: f32[64,32], index: 8, kind: input, shape index: {}]
  %s9 = inlined_call_operand.vmem [shape: f32[1,32], index: 9, kind: input, shape index: {}]
  %s10 = inlined_call_operand.vmem [shape: f32[64,64], index: 10, kind: input, shape index: {}]
  %s11 = inlined_call_operand.vmem [shape: f32[1,64], index: 11, kind: input, shape index: {}]
  %s12 = inlined_call_operand.vmem [shape: f32[64,16], index: 12, kind: input, shape index: {}]
  %s13 = inlined_call_operand.vmem [shape: f32[1,16], index: 13, kind: input, shape index: {}]
  %s14 = inlined_call_operand.vmem [shape: f32[128,128], index: 14, kind: output, shape index: {}]
  %s15 = sld [smem:[#allocation0]]
  $region66: #{cvae_hybrid_forward.1} parent=0
    _
  %s17 = ssub.s32 1, %s15
  %s18 = scalar_select 0, %s17, %s15
  // Predicated region
  $region2: #{cvae_hybrid_forward.1} parent=0 // pred_check
    _
  $region3: #{cvae_hybrid_forward.1} parent=0 // pred_check_branch
    %20 = sbr.rel (0) target = $region5
  $region4: #{cvae_hybrid_forward.1} parent=0 // pred_region
    _
  $region5: #{cvae_hybrid_forward.1} parent=0 // pred_fallthru
    _
  // Predicated region
  $region6: #{cvae_hybrid_forward.1} parent=0 // pred_check
    _
  $region7: #{cvae_hybrid_forward.1} parent=0 // pred_check_branch
    %22 = sbr.rel (0) target = $region9
  $region8: #{cvae_hybrid_forward.1} parent=0 // pred_region
    _
  $region9: #{cvae_hybrid_forward.1} parent=0 // pred_fallthru
    _
  // Predicated region
  $region10: #{cvae_hybrid_forward.1} parent=0 // pred_check
    _
  $region11: #{cvae_hybrid_forward.1} parent=0 // pred_check_branch
    %24 = sbr.rel (0) target = $region13
  $region12: #{cvae_hybrid_forward.1} parent=0 // pred_region
    _
  $region13: #{cvae_hybrid_forward.1} parent=0 // pred_fallthru
    _
  // Predicated region
  $region14: #{cvae_hybrid_forward.1} parent=0 // pred_check
    _
  $region15: #{cvae_hybrid_forward.1} parent=0 // pred_check_branch
    %26 = sbr.rel (0) target = $region17
  $region16: #{cvae_hybrid_forward.1} parent=0 // pred_region
    _
  $region17: #{cvae_hybrid_forward.1} parent=0 // pred_fallthru
    _
  // Predicated region
  $region18: #{cvae_hybrid_forward.1} parent=0 // pred_check
    _
  $region19: #{cvae_hybrid_forward.1} parent=0 // pred_check_branch
    %28 = sbr.rel (0) target = $region21
  $region20: #{cvae_hybrid_forward.1} parent=0 // pred_region
    _
  $region21: #{cvae_hybrid_forward.1} parent=0 // pred_fallthru
    _
  // Predicated region
  $region22: #{cvae_hybrid_forward.1} parent=0 // pred_check
    _
  $region23: #{cvae_hybrid_forward.1} parent=0 // pred_check_branch
    %30 = sbr.rel (0) target = $region25
  $region24: #{cvae_hybrid_forward.1} parent=0 // pred_region
    _
  $region25: #{cvae_hybrid_forward.1} parent=0 // pred_fallthru
    _
  // Predicated region
  $region26: #{cvae_hybrid_forward.1} parent=0 // pred_check
    _
  $region27: #{cvae_hybrid_forward.1} parent=0 // pred_check_branch
    %32 = sbr.rel (0) target = $region29
  $region28: #{cvae_hybrid_forward.1} parent=0 // pred_region
    _
  $region29: #{cvae_hybrid_forward.1} parent=0 // pred_fallthru
    _
  // Predicated region
  $region30: #{cvae_hybrid_forward.1} parent=0 // pred_check
    _
  $region31: #{cvae_hybrid_forward.1} parent=0 // pred_check_branch
    %34 = sbr.rel (0) target = $region33
  $region32: #{cvae_hybrid_forward.1} parent=0 // pred_region
    _
  $region33: #{cvae_hybrid_forward.1} parent=0 // pred_fallthru
    _
  // Predicated region
  $region34: #{cvae_hybrid_forward.1} parent=0 // pred_check
    _
  $region35: #{cvae_hybrid_forward.1} parent=0 // pred_check_branch
    %36 = sbr.rel (0) target = $region37
  $region36: #{cvae_hybrid_forward.1} parent=0 // pred_region
    _
  $region37: #{cvae_hybrid_forward.1} parent=0 // pred_fallthru
    _
  // Predicated region
  $region38: #{cvae_hybrid_forward.1} parent=0 // pred_check
    _
  $region39: #{cvae_hybrid_forward.1} parent=0 // pred_check_branch
    %38 = sbr.rel (0) target = $region41
  $region40: #{cvae_hybrid_forward.1} parent=0 // pred_region
    _
  $region41: #{cvae_hybrid_forward.1} parent=0 // pred_fallthru
    _
  // Predicated region
  $region42: #{cvae_hybrid_forward.1} parent=0 // pred_check
    _
  $region43: #{cvae_hybrid_forward.1} parent=0 // pred_check_branch
    %40 = sbr.rel (0) target = $region45
  $region44: #{cvae_hybrid_forward.1} parent=0 // pred_region
    _
  $region45: #{cvae_hybrid_forward.1} parent=0 // pred_fallthru
    _
  // Predicated region
  $region46: #{cvae_hybrid_forward.1} parent=0 // pred_check
    _
  $region47: #{cvae_hybrid_forward.1} parent=0 // pred_check_branch
    %42 = sbr.rel (0) target = $region49
  $region48: #{cvae_hybrid_forward.1} parent=0 // pred_region
    _
  $region49: #{cvae_hybrid_forward.1} parent=0 // pred_fallthru
    _
  // Predicated region
  $region50: #{cvae_hybrid_forward.1} parent=0 // pred_check
    _
  $region51: #{cvae_hybrid_forward.1} parent=0 // pred_check_branch
    %44 = sbr.rel (0) target = $region53
  $region52: #{cvae_hybrid_forward.1} parent=0 // pred_region
    _
  $region53: #{cvae_hybrid_forward.1} parent=0 // pred_fallthru
    _
  // Predicated region
  $region54: #{cvae_hybrid_forward.1} parent=0 // pred_check
    _
  $region55: #{cvae_hybrid_forward.1} parent=0 // pred_check_branch
    %46 = sbr.rel (0) target = $region57
  $region56: #{cvae_hybrid_forward.1} parent=0 // pred_region
    _
  $region57: #{cvae_hybrid_forward.1} parent=0 // pred_fallthru
    _
  %v47 = vld [vmem:[%s0] sm:$0xff]
  %v48 = vld [vmem:[%s0 + $0x8] sm:$0xff]
  %v49 = vld [vmem:[%s0 + $0x10] sm:$0xff]
  %v50 = vld [vmem:[%s0 + $0x18] sm:$0xff]
  %v51 = vld [vmem:[%s0 + $0x20] sm:$0xff]
  %v52 = vld [vmem:[%s0 + $0x28] sm:$0xff]
  %v53 = vld [vmem:[%s0 + $0x30] sm:$0xff]
  %v54 = vld [vmem:[%s0 + $0x38] sm:$0xff]
  %v55 = vld [vmem:[%s0 + $0x40] sm:$0xff]
  %v56 = vld [vmem:[%s0 + $0x48] sm:$0xff]
  %v57 = vld [vmem:[%s0 + $0x50] sm:$0xff]
  %v58 = vld [vmem:[%s0 + $0x58] sm:$0xff]
  %v59 = vld [vmem:[%s0 + $0x60] sm:$0xff]
  %v60 = vld [vmem:[%s0 + $0x68] sm:$0xff]
  %v61 = vld [vmem:[%s0 + $0x70] sm:$0xff]
  %v62 = vld [vmem:[%s0 + $0x78] sm:$0xff]
  %v63 = vld [vmem:[%s1] sm:$0xff]
  %v64 = vld [vmem:[%s1 + $0x8] sm:$0xff]
  %v65 = vld [vmem:[%s1 + $0x10] sm:$0xff]
  %v66 = vld [vmem:[%s1 + $0x18] sm:$0xff]
  %v67 = vld [vmem:[%s1 + $0x20] sm:$0xff]
  %v68 = vld [vmem:[%s1 + $0x28] sm:$0xff]
  %v69 = vld [vmem:[%s1 + $0x30] sm:$0xff]
  %v70 = vld [vmem:[%s1 + $0x38] sm:$0xff]
  %v71 = vld [vmem:[%s1 + $0x40] sm:$0xff]
  %v72 = vld [vmem:[%s1 + $0x48] sm:$0xff]
  %v73 = vld [vmem:[%s1 + $0x50] sm:$0xff]
  %v74 = vld [vmem:[%s1 + $0x58] sm:$0xff]
  %v75 = vld [vmem:[%s1 + $0x60] sm:$0xff]
  %v76 = vld [vmem:[%s1 + $0x68] sm:$0xff]
  %v77 = vld [vmem:[%s1 + $0x70] sm:$0xff]
  %v78 = vld [vmem:[%s1 + $0x78] sm:$0xff]
  %v79 = vld [vmem:[%s2] sm:$0xff]
  %v80 = vld [vmem:[%s2 + $0x8] sm:$0xff]
  %v81 = vld [vmem:[%s2 + $0x10] sm:$0xff]
  %v82 = vld [vmem:[%s2 + $0x18] sm:$0xff]
  %v83 = vld [vmem:[%s2 + $0x20] sm:$0xff]
  %v84 = vld [vmem:[%s2 + $0x28] sm:$0xff]
  %v85 = vld [vmem:[%s3] sm:$0x1]
  %v87 = vlaneseq
  %v88 = vshrl.u32 %v87, 7
  %v89 = vsub.s32 0, %v88
  %v90 = vrot.slane %v85, %v89
  %vm92 = vcmask 392192
  %v94 = vsel %vm92, %v47, 0
  %v97 = vsel %vm92, %v48, 0
  %v100 = vsel %vm92, %v49, 0
  %v103 = vsel %vm92, %v50, 0
  %v106 = vsel %vm92, %v51, 0
  %v109 = vsel %vm92, %v52, 0
  %v112 = vsel %vm92, %v53, 0
  %v115 = vsel %vm92, %v54, 0
  %v118 = vsel %vm92, %v55, 0
  %v121 = vsel %vm92, %v56, 0
  %v124 = vsel %vm92, %v57, 0
  %v127 = vsel %vm92, %v58, 0
  %v130 = vsel %vm92, %v59, 0
  %v133 = vsel %vm92, %v60, 0
  %v136 = vsel %vm92, %v61, 0
  %v139 = vsel %vm92, %v62, 0
  %141 = vmatprep.subr.mxu0 0.0
  %142 = vmatpush1.msra.mxu0 %v79
  %143 = vmatprep.subr.mxu0 0.0
  %144 = vmatpush1.msra.mxu0 %v80
  %145 = vmatprep.subr.mxu0 0.0
  %146 = vmatpush1.msra.mxu0 %v81
  %147 = vmatprep.subr.mxu0 0.0
  %148 = vmatpush1.msra.mxu0 %v82
  %149 = vmatprep.subr.mxu0 0.0
  %150 = vmatpush1.msra.mxu0 %v83
  %151 = vmatprep.subr.mxu0 0.0
  %152 = vmatpush1.msra.mxu0 %v84
  %153 = vmatprep.subr.mxu0 0.0
  %154 = vmatpush1.msra.mxu0 0.0
  %155 = vmatprep.subr.mxu0 0.0
  %156 = vmatpush1.msra.mxu0 0.0
  %157 = vmatprep.subr.mxu0 0.0
  %158 = vmatpush1.msra.mxu0 0.0
  %159 = vmatprep.subr.mxu0 0.0
  %160 = vmatpush1.msra.mxu0 0.0
  %161 = vmatprep.subr.mxu0 0.0
  %162 = vmatpush1.msra.mxu0 0.0
  %163 = vmatprep.subr.mxu0 0.0
  %164 = vmatpush1.msra.mxu0 0.0
  %165 = vmatprep.subr.mxu0 0.0
  %166 = vmatpush1.msra.mxu0 0.0
  %167 = vmatprep.subr.mxu0 0.0
  %168 = vmatpush1.msra.mxu0 0.0
  %169 = vmatprep.subr.mxu0 0.0
  %170 = vmatpush1.msra.mxu0 0.0
  %171 = vmatprep.subr.mxu0 0.0
  %172 = vmatpush1.msra.mxu0 0.0
  %173 = vmatprep.subr.mxu0 0.0
  %174 = vmatpush1.msra.mxu0 0.0
  %175 = vmatprep.subr.mxu0 0.0
  %176 = vmatpush1.msra.mxu0 0.0
  %177 = vmatprep.subr.mxu0 0.0
  %178 = vmatpush1.msra.mxu0 0.0
  %179 = vmatprep.subr.mxu0 0.0
  %180 = vmatpush1.msra.mxu0 0.0
  %181 = vmatprep.subr.mxu0 0.0
  %182 = vmatpush1.msra.mxu0 0.0
  %183 = vmatprep.subr.mxu0 0.0
  %184 = vmatpush1.msra.mxu0 0.0
  %185 = vmatprep.subr.mxu0 0.0
  %186 = vmatpush1.msra.mxu0 0.0
  %187 = vmatprep.subr.mxu0 0.0
  %188 = vmatpush1.msra.mxu0 0.0
  %189 = vmatprep.subr.mxu0 0.0
  %190 = vmatpush1.msra.mxu0 0.0
  %191 = vmatprep.subr.mxu0 0.0
  %192 = vmatpush1.msra.mxu0 0.0
  %193 = vmatprep.subr.mxu0 0.0
  %194 = vmatpush1.msra.mxu0 0.0
  %195 = vmatprep.subr.mxu0 0.0
  %196 = vmatpush1.msra.mxu0 0.0
  %197 = vmatprep.subr.mxu0 0.0
  %198 = vmatpush1.msra.mxu0 0.0
  %199 = vmatprep.subr.mxu0 0.0
  %200 = vmatpush1.msra.mxu0 0.0
  %201 = vmatprep.subr.mxu0 0.0
  %202 = vmatpush1.msra.mxu0 0.0
  %203 = vmatprep.subr.mxu0 0.0
  %204 = vmatpush1.msra.mxu0 0.0
  %205 = vmatprep.mubr.f32.mxu0 0.0
  %206 = vmatmul.mubr.f32.gmra.mrb[0].mxu0 %v94
  %v207 = vpop.f32.mrb[0].mxu0
  %v208 = vadd.f32 %v90, %v207
  %v209 = vpop.f32.mrb[0].mxu0
  %210 = vmatprep.mubr.f32.mxu0 0.0
  %211 = vmatmul.mubr.f32.gmra.mrb[0].mxu0 %v97
  %v212 = vpop.f32.mrb[0].mxu0
  %v213 = vadd.f32 %v90, %v212
  %v214 = vpop.f32.mrb[0].mxu0
  %215 = vmatprep.mubr.f32.mxu0 0.0
  %216 = vmatmul.mubr.f32.gmra.mrb[0].mxu0 %v100
  %v217 = vpop.f32.mrb[0].mxu0
  %v218 = vadd.f32 %v90, %v217
  %v219 = vpop.f32.mrb[0].mxu0
  %220 = vmatprep.mubr.f32.mxu0 0.0
  %221 = vmatmul.mubr.f32.gmra.mrb[0].mxu0 %v103
  %v222 = vpop.f32.mrb[0].mxu0
  %v223 = vadd.f32 %v90, %v222
  %v224 = vpop.f32.mrb[0].mxu0
  %225 = vmatprep.mubr.f32.mxu0 0.0
  %226 = vmatmul.mubr.f32.gmra.mrb[0].mxu0 %v106
  %v227 = vpop.f32.mrb[0].mxu0
  %v228 = vadd.f32 %v90, %v227
  %v229 = vpop.f32.mrb[0].mxu0
  %230 = vmatprep.mubr.f32.mxu0 0.0
  %231 = vmatmul.mubr.f32.gmra.mrb[0].mxu0 %v109
  %v232 = vpop.f32.mrb[0].mxu0
  %v233 = vadd.f32 %v90, %v232
  %v234 = vpop.f32.mrb[0].mxu0
  %235 = vmatprep.mubr.f32.mxu0 0.0
  %236 = vmatmul.mubr.f32.gmra.mrb[0].mxu0 %v112
  %v237 = vpop.f32.mrb[0].mxu0
  %v238 = vadd.f32 %v90, %v237
  %v239 = vpop.f32.mrb[0].mxu0
  %240 = vmatprep.mubr.f32.mxu0 0.0
  %241 = vmatmul.mubr.f32.gmra.mrb[0].mxu0 %v115
  %v242 = vpop.f32.mrb[0].mxu0
  %v243 = vadd.f32 %v90, %v242
  %v244 = vpop.f32.mrb[0].mxu0
  %245 = vmatprep.mubr.f32.mxu0 0.0
  %246 = vmatmul.mubr.f32.gmra.mrb[0].mxu0 %v118
  %v247 = vpop.f32.mrb[0].mxu0
  %v248 = vadd.f32 %v90, %v247
  %v249 = vpop.f32.mrb[0].mxu0
  %250 = vmatprep.mubr.f32.mxu0 0.0
  %251 = vmatmul.mubr.f32.gmra.mrb[0].mxu0 %v121
  %v252 = vpop.f32.mrb[0].mxu0
  %v253 = vadd.f32 %v90, %v252
  %v254 = vpop.f32.mrb[0].mxu0
  %255 = vmatprep.mubr.f32.mxu0 0.0
  %256 = vmatmul.mubr.f32.gmra.mrb[0].mxu0 %v124
  %v257 = vpop.f32.mrb[0].mxu0
  %v258 = vadd.f32 %v90, %v257
  %v259 = vpop.f32.mrb[0].mxu0
  %260 = vmatprep.mubr.f32.mxu0 0.0
  %261 = vmatmul.mubr.f32.gmra.mrb[0].mxu0 %v127
  %v262 = vpop.f32.mrb[0].mxu0
  %v263 = vadd.f32 %v90, %v262
  %v264 = vpop.f32.mrb[0].mxu0
  %265 = vmatprep.mubr.f32.mxu0 0.0
  %266 = vmatmul.mubr.f32.gmra.mrb[0].mxu0 %v130
  %v267 = vpop.f32.mrb[0].mxu0
  %v268 = vadd.f32 %v90, %v267
  %v269 = vpop.f32.mrb[0].mxu0
  %270 = vmatprep.mubr.f32.mxu0 0.0
  %271 = vmatmul.mubr.f32.gmra.mrb[0].mxu0 %v133
  %v272 = vpop.f32.mrb[0].mxu0
  %v273 = vadd.f32 %v90, %v272
  %v274 = vpop.f32.mrb[0].mxu0
  %275 = vmatprep.mubr.f32.mxu0 0.0
  %276 = vmatmul.mubr.f32.gmra.mrb[0].mxu0 %v136
  %v277 = vpop.f32.mrb[0].mxu0
  %v278 = vadd.f32 %v90, %v277
  %v279 = vpop.f32.mrb[0].mxu0
  %280 = vmatprep.mubr.f32.mxu0 0.0
  %281 = vmatmul.mubr.f32.gmra.mrb[0].mxu0 %v139
  %v282 = vpop.f32.mrb[0].mxu0
  %v283 = vadd.f32 %v90, %v282
  %v284 = vpop.f32.mrb[0].mxu0
  %285 = vdwg.mxu0
  %v286 = vmax.f32 %v208, 0.0
  %v287 = vmax.f32 %v213, 0.0
  %v288 = vmax.f32 %v218, 0.0
  %v289 = vmax.f32 %v223, 0.0
  %v290 = vmax.f32 %v228, 0.0
  %v291 = vmax.f32 %v233, 0.0
  %v292 = vmax.f32 %v238, 0.0
  %v293 = vmax.f32 %v243, 0.0
  %v294 = vmax.f32 %v248, 0.0
  %v295 = vmax.f32 %v253, 0.0
  %v296 = vmax.f32 %v258, 0.0
  %v297 = vmax.f32 %v263, 0.0
  %v298 = vmax.f32 %v268, 0.0
  %v299 = vmax.f32 %v273, 0.0
  %v300 = vmax.f32 %v278, 0.0
  %v301 = vmax.f32 %v283, 0.0
  %v302 = vld [vmem:[%s4] sm:$0xff]
  %v303 = vld [vmem:[%s4 + $0x8] sm:$0xff]
  %v304 = vld [vmem:[%s4 + $0x10] sm:$0xff]
  %v305 = vld [vmem:[%s4 + $0x18] sm:$0xff]
  %v306 = vld [vmem:[%s4 + $0x20] sm:$0xff]
  %v307 = vld [vmem:[%s4 + $0x28] sm:$0xff]
  %v308 = vld [vmem:[%s4 + $0x30] sm:$0xff]
  %v309 = vld [vmem:[%s4 + $0x38] sm:$0xff]
  %v310 = vld [vmem:[%s5] sm:$0x1]
  %v312 = vlaneseq
  %v313 = vshrl.u32 %v312, 7
  %v314 = vsub.s32 0, %v313
  %v315 = vrot.slane %v310, %v314
  %vm317 = vcmask 523264
  %v319 = vsel %vm317, %v286, 0
  %v322 = vsel %vm317, %v287, 0
  %v325 = vsel %vm317, %v288, 0
  %v328 = vsel %vm317, %v289, 0
  %v331 = vsel %vm317, %v290, 0
  %v334 = vsel %vm317, %v291, 0
  %v337 = vsel %vm317, %v292, 0
  %v340 = vsel %vm317, %v293, 0
  %v343 = vsel %vm317, %v294, 0
  %v346 = vsel %vm317, %v295, 0
  %v349 = vsel %vm317, %v296, 0
  %v352 = vsel %vm317, %v297, 0
  %v355 = vsel %vm317, %v298, 0
  %v358 = vsel %vm317, %v299, 0
  %v361 = vsel %vm317, %v300, 0
  %v364 = vsel %vm317, %v301, 0
  %366 = vmatprep.subr.mxu0 0.0
  %367 = vmatpush1.msra.mxu0 %v302
  %368 = vmatprep.subr.mxu0 0.0
  %369 = vmatpush1.msra.mxu0 %v303
  %370 = vmatprep.subr.mxu0 0.0
  %371 = vmatpush1.msra.mxu0 %v304
  %372 = vmatprep.subr.mxu0 0.0
  %373 = vmatpush1.msra.mxu0 %v305
  %374 = vmatprep.subr.mxu0 0.0
  %375 = vmatpush1.msra.mxu0 %v306
  %376 = vmatprep.subr.mxu0 0.0
  %377 = vmatpush1.msra.mxu0 %v307
  %378 = vmatprep.subr.mxu0 0.0
  %379 = vmatpush1.msra.mxu0 %v308
  %380 = vmatprep.subr.mxu0 0.0
  %381 = vmatpush1.msra.mxu0 %v309
  %382 = vmatprep.subr.mxu0 0.0
  %383 = vmatpush1.msra.mxu0 0.0
  %384 = vmatprep.subr.mxu0 0.0
  %385 = vmatpush1.msra.mxu0 0.0
  %386 = vmatprep.subr.mxu0 0.0
  %387 = vmatpush1.msra.mxu0 0.0
  %388 = vmatprep.subr.mxu0 0.0
  %389 = vmatpush1.msra.mxu0 0.0
  %390 = vmatprep.subr.mxu0 0.0
  %391 = vmatpush1.msra.mxu0 0.0
  %392 = vmatprep.subr.mxu0 0.0
  %393 = vmatpush1.msra.mxu0 0.0
  %394 = vmatprep.subr.mxu0 0.0
  %395 = vmatpush1.msra.mxu0 0.0
  %396 = vmatprep.subr.mxu0 0.0
  %397 = vmatpush1.msra.mxu0 0.0
  %398 = vmatprep.subr.mxu0 0.0
  %399 = vmatpush1.msra.mxu0 0.0
  %400 = vmatprep.subr.mxu0 0.0
  %401 = vmatpush1.msra.mxu0 0.0
  %402 = vmatprep.subr.mxu0 0.0
  %403 = vmatpush1.msra.mxu0 0.0
  %404 = vmatprep.subr.mxu0 0.0
  %405 = vmatpush1.msra.mxu0 0.0
  %406 = vmatprep.subr.mxu0 0.0
  %407 = vmatpush1.msra.mxu0 0.0
  %408 = vmatprep.subr.mxu0 0.0
  %409 = vmatpush1.msra.mxu0 0.0
  %410 = vmatprep.subr.mxu0 0.0
  %411 = vmatpush1.msra.mxu0 0.0
  %412 = vmatprep.subr.mxu0 0.0
  %413 = vmatpush1.msra.mxu0 0.0
  %414 = vmatprep.subr.mxu0 0.0
  %415 = vmatpush1.msra.mxu0 0.0
  %416 = vmatprep.subr.mxu0 0.0
  %417 = vmatpush1.msra.mxu0 0.0
  %418 = vmatprep.subr.mxu0 0.0
  %419 = vmatpush1.msra.mxu0 0.0
  %420 = vmatprep.subr.mxu0 0.0
  %421 = vmatpush1.msra.mxu0 0.0
  %422 = vmatprep.subr.mxu0 0.0
  %423 = vmatpush1.msra.mxu0 0.0
  %424 = vmatprep.subr.mxu0 0.0
  %425 = vmatpush1.msra.mxu0 0.0
  %426 = vmatprep.subr.mxu0 0.0
  %427 = vmatpush1.msra.mxu0 0.0
  %428 = vmatprep.subr.mxu0 0.0
  %429 = vmatpush1.msra.mxu0 0.0
  %430 = vmatprep.mubr.f32.mxu0 0.0
  %431 = vmatmul.mubr.f32.gmra.mrb[0].mxu0 %v319
  %v432 = vpop.f32.mrb[0].mxu0
  %v433 = vadd.f32 %v315, %v432
  %v434 = vpop.f32.mrb[0].mxu0
  %435 = vmatprep.mubr.f32.mxu0 0.0
  %436 = vmatmul.mubr.f32.gmra.mrb[0].mxu0 %v322
  %v437 = vpop.f32.mrb[0].mxu0
  %v438 = vadd.f32 %v315, %v437
  %v439 = vpop.f32.mrb[0].mxu0
  %440 = vmatprep.mubr.f32.mxu0 0.0
  %441 = vmatmul.mubr.f32.gmra.mrb[0].mxu0 %v325
  %v442 = vpop.f32.mrb[0].mxu0
  %v443 = vadd.f32 %v315, %v442
  %v444 = vpop.f32.mrb[0].mxu0
  %445 = vmatprep.mubr.f32.mxu0 0.0
  %446 = vmatmul.mubr.f32.gmra.mrb[0].mxu0 %v328
  %v447 = vpop.f32.mrb[0].mxu0
  %v448 = vadd.f32 %v315, %v447
  %v449 = vpop.f32.mrb[0].mxu0
  %450 = vmatprep.mubr.f32.mxu0 0.0
  %451 = vmatmul.mubr.f32.gmra.mrb[0].mxu0 %v331
  %v452 = vpop.f32.mrb[0].mxu0
  %v453 = vadd.f32 %v315, %v452
  %v454 = vpop.f32.mrb[0].mxu0
  %455 = vmatprep.mubr.f32.mxu0 0.0
  %456 = vmatmul.mubr.f32.gmra.mrb[0].mxu0 %v334
  %v457 = vpop.f32.mrb[0].mxu0
  %v458 = vadd.f32 %v315, %v457
  %v459 = vpop.f32.mrb[0].mxu0
  %460 = vmatprep.mubr.f32.mxu0 0.0
  %461 = vmatmul.mubr.f32.gmra.mrb[0].mxu0 %v337
  %v462 = vpop.f32.mrb[0].mxu0
  %v463 = vadd.f32 %v315, %v462
  %v464 = vpop.f32.mrb[0].mxu0
  %465 = vmatprep.mubr.f32.mxu0 0.0
  %466 = vmatmul.mubr.f32.gmra.mrb[0].mxu0 %v340
  %v467 = vpop.f32.mrb[0].mxu0
  %v468 = vadd.f32 %v315, %v467
  %v469 = vpop.f32.mrb[0].mxu0
  %470 = vmatprep.mubr.f32.mxu0 0.0
  %471 = vmatmul.mubr.f32.gmra.mrb[0].mxu0 %v343
  %v472 = vpop.f32.mrb[0].mxu0
  %v473 = vadd.f32 %v315, %v472
  %v474 = vpop.f32.mrb[0].mxu0
  %475 = vmatprep.mubr.f32.mxu0 0.0
  %476 = vmatmul.mubr.f32.gmra.mrb[0].mxu0 %v346
  %v477 = vpop.f32.mrb[0].mxu0
  %v478 = vadd.f32 %v315, %v477
  %v479 = vpop.f32.mrb[0].mxu0
  %480 = vmatprep.mubr.f32.mxu0 0.0
  %481 = vmatmul.mubr.f32.gmra.mrb[0].mxu0 %v349
  %v482 = vpop.f32.mrb[0].mxu0
  %v483 = vadd.f32 %v315, %v482
  %v484 = vpop.f32.mrb[0].mxu0
  %485 = vmatprep.mubr.f32.mxu0 0.0
  %486 = vmatmul.mubr.f32.gmra.mrb[0].mxu0 %v352
  %v487 = vpop.f32.mrb[0].mxu0
  %v488 = vadd.f32 %v315, %v487
  %v489 = vpop.f32.mrb[0].mxu0
  %490 = vmatprep.mubr.f32.mxu0 0.0
  %491 = vmatmul.mubr.f32.gmra.mrb[0].mxu0 %v355
  %v492 = vpop.f32.mrb[0].mxu0
  %v493 = vadd.f32 %v315, %v492
  %v494 = vpop.f32.mrb[0].mxu0
  %495 = vmatprep.mubr.f32.mxu0 0.0
  %496 = vmatmul.mubr.f32.gmra.mrb[0].mxu0 %v358
  %v497 = vpop.f32.mrb[0].mxu0
  %v498 = vadd.f32 %v315, %v497
  %v499 = vpop.f32.mrb[0].mxu0
  %500 = vmatprep.mubr.f32.mxu0 0.0
  %501 = vmatmul.mubr.f32.gmra.mrb[0].mxu0 %v361
  %v502 = vpop.f32.mrb[0].mxu0
  %v503 = vadd.f32 %v315, %v502
  %v504 = vpop.f32.mrb[0].mxu0
  %505 = vmatprep.mubr.f32.mxu0 0.0
  %506 = vmatmul.mubr.f32.gmra.mrb[0].mxu0 %v364
  %v507 = vpop.f32.mrb[0].mxu0
  %v508 = vadd.f32 %v315, %v507
  %v509 = vpop.f32.mrb[0].mxu0
  %510 = vdwg.mxu0
  %v511 = vmul.f32 %v433, 0.5
  %v512 = vmul.f32 %v438, 0.5
  %v513 = vmul.f32 %v443, 0.5
  %v514 = vmul.f32 %v448, 0.5
  %v515 = vmul.f32 %v453, 0.5
  %v516 = vmul.f32 %v458, 0.5
  %v517 = vmul.f32 %v463, 0.5
  %v518 = vmul.f32 %v468, 0.5
  %v519 = vmul.f32 %v473, 0.5
  %v520 = vmul.f32 %v478, 0.5
  %v521 = vmul.f32 %v483, 0.5
  %v522 = vmul.f32 %v488, 0.5
  %v523 = vmul.f32 %v493, 0.5
  %v524 = vmul.f32 %v498, 0.5
  %v525 = vmul.f32 %v503, 0.5
  %v526 = vmul.f32 %v508, 0.5
  %v527 = vmul.f32 %v511, 1.442695
  %v528 = vpow.pop %v527
  %v529 = vmul.f32 %v512, 1.442695
  %v530 = vpow.pop %v529
  %v531 = vmul.f32 %v513, 1.442695
  %v532 = vpow.pop %v531
  %v533 = vmul.f32 %v514, 1.442695
  %v534 = vpow.pop %v533
  %v535 = vmul.f32 %v515, 1.442695
  %v536 = vpow.pop %v535
  %v537 = vmul.f32 %v516, 1.442695
  %v538 = vpow.pop %v537
  %v539 = vmul.f32 %v517, 1.442695
  %v540 = vpow.pop %v539
  %v541 = vmul.f32 %v518, 1.442695
  %v542 = vpow.pop %v541
  %v543 = vmul.f32 %v519, 1.442695
  %v544 = vpow.pop %v543
  %v545 = vmul.f32 %v520, 1.442695
  %v546 = vpow.pop %v545
  %v547 = vmul.f32 %v521, 1.442695
  %v548 = vpow.pop %v547
  %v549 = vmul.f32 %v522, 1.442695
  %v550 = vpow.pop %v549
  %v551 = vmul.f32 %v523, 1.442695
  %v552 = vpow.pop %v551
  %v553 = vmul.f32 %v524, 1.442695
  %v554 = vpow.pop %v553
  %v555 = vmul.f32 %v525, 1.442695
  %v556 = vpow.pop %v555
  %v557 = vmul.f32 %v526, 1.442695
  %v558 = vpow.pop %v557
  %575 = vrot.lane.b32.xlu0 %v63, 8
  %v576 = vpop.permute.xlu0 %575
  %577 = vrot.lane.b32.xlu0 %v64, 8
  %v578 = vpop.permute.xlu0 %577
  %579 = vrot.lane.b32.xlu0 %v65, 8
  %v580 = vpop.permute.xlu0 %579
  %581 = vrot.lane.b32.xlu0 %v66, 8
  %v582 = vpop.permute.xlu0 %581
  %583 = vrot.lane.b32.xlu0 %v67, 8
  %v584 = vpop.permute.xlu0 %583
  %585 = vrot.lane.b32.xlu0 %v68, 8
  %v586 = vpop.permute.xlu0 %585
  %587 = vrot.lane.b32.xlu0 %v69, 8
  %v588 = vpop.permute.xlu0 %587
  %589 = vrot.lane.b32.xlu0 %v70, 8
  %v590 = vpop.permute.xlu0 %589
  %591 = vrot.lane.b32.xlu0 %v71, 8
  %v592 = vpop.permute.xlu0 %591
  %593 = vrot.lane.b32.xlu0 %v72, 8
  %v594 = vpop.permute.xlu0 %593
  %595 = vrot.lane.b32.xlu0 %v73, 8
  %v596 = vpop.permute.xlu0 %595
  %597 = vrot.lane.b32.xlu0 %v74, 8
  %v598 = vpop.permute.xlu0 %597
  %599 = vrot.lane.b32.xlu0 %v75, 8
  %v600 = vpop.permute.xlu0 %599
  %601 = vrot.lane.b32.xlu0 %v76, 8
  %v602 = vpop.permute.xlu0 %601
  %603 = vrot.lane.b32.xlu0 %v77, 8
  %v604 = vpop.permute.xlu0 %603
  %605 = vrot.lane.b32.xlu0 %v78, 8
  %v606 = vpop.permute.xlu0 %605
  %v623 = vmul.f32 %v528, %v576
  %v624 = vmul.f32 %v530, %v578
  %v625 = vmul.f32 %v532, %v580
  %v626 = vmul.f32 %v534, %v582
  %v627 = vmul.f32 %v536, %v584
  %v628 = vmul.f32 %v538, %v586
  %v629 = vmul.f32 %v540, %v588
  %v630 = vmul.f32 %v542, %v590
  %v631 = vmul.f32 %v544, %v592
  %v632 = vmul.f32 %v546, %v594
  %v633 = vmul.f32 %v548, %v596
  %v634 = vmul.f32 %v550, %v598
  %v635 = vmul.f32 %v552, %v600
  %v636 = vmul.f32 %v554, %v602
  %v637 = vmul.f32 %v556, %v604
  %v638 = vmul.f32 %v558, %v606
  %655 = vrot.lane.b32.xlu0 %v623, 120
  %v656 = vpop.permute.xlu0 %655
  %657 = vrot.lane.b32.xlu0 %v624, 120
  %v658 = vpop.permute.xlu0 %657
  %659 = vrot.lane.b32.xlu0 %v625, 120
  %v660 = vpop.permute.xlu0 %659
  %661 = vrot.lane.b32.xlu0 %v626, 120
  %v662 = vpop.permute.xlu0 %661
  %663 = vrot.lane.b32.xlu0 %v627, 120
  %v664 = vpop.permute.xlu0 %663
  %665 = vrot.lane.b32.xlu0 %v628, 120
  %v666 = vpop.permute.xlu0 %665
  %667 = vrot.lane.b32.xlu0 %v629, 120
  %v668 = vpop.permute.xlu0 %667
  %669 = vrot.lane.b32.xlu0 %v630, 120
  %v670 = vpop.permute.xlu0 %669
  %671 = vrot.lane.b32.xlu0 %v631, 120
  %v672 = vpop.permute.xlu0 %671
  %673 = vrot.lane.b32.xlu0 %v632, 120
  %v674 = vpop.permute.xlu0 %673
  %675 = vrot.lane.b32.xlu0 %v633, 120
  %v676 = vpop.permute.xlu0 %675
  %677 = vrot.lane.b32.xlu0 %v634, 120
  %v678 = vpop.permute.xlu0 %677
  %679 = vrot.lane.b32.xlu0 %v635, 120
  %v680 = vpop.permute.xlu0 %679
  %681 = vrot.lane.b32.xlu0 %v636, 120
  %v682 = vpop.permute.xlu0 %681
  %683 = vrot.lane.b32.xlu0 %v637, 120
  %v684 = vpop.permute.xlu0 %683
  %685 = vrot.lane.b32.xlu0 %v638, 120
  %v686 = vpop.permute.xlu0 %685
  %v703 = vadd.f32 %v433, %v656
  %v704 = vadd.f32 %v438, %v658
  %v705 = vadd.f32 %v443, %v660
  %v706 = vadd.f32 %v448, %v662
  %v707 = vadd.f32 %v453, %v664
  %v708 = vadd.f32 %v458, %v666
  %v709 = vadd.f32 %v463, %v668
  %v710 = vadd.f32 %v468, %v670
  %v711 = vadd.f32 %v473, %v672
  %v712 = vadd.f32 %v478, %v674
  %v713 = vadd.f32 %v483, %v676
  %v714 = vadd.f32 %v488, %v678
  %v715 = vadd.f32 %v493, %v680
  %v716 = vadd.f32 %v498, %v682
  %v717 = vadd.f32 %v503, %v684
  %v718 = vadd.f32 %v508, %v686
  %719 = vrot.lane.b32.xlu0 %v47, 104
  %v720 = vpop.permute.xlu0 %719
  %721 = vrot.lane.b32.xlu0 %v48, 104
  %v722 = vpop.permute.xlu0 %721
  %723 = vrot.lane.b32.xlu0 %v49, 104
  %v724 = vpop.permute.xlu0 %723
  %725 = vrot.lane.b32.xlu0 %v50, 104
  %v726 = vpop.permute.xlu0 %725
  %727 = vrot.lane.b32.xlu0 %v51, 104
  %v728 = vpop.permute.xlu0 %727
  %729 = vrot.lane.b32.xlu0 %v52, 104
  %v730 = vpop.permute.xlu0 %729
  %731 = vrot.lane.b32.xlu0 %v53, 104
  %v732 = vpop.permute.xlu0 %731
  %733 = vrot.lane.b32.xlu0 %v54, 104
  %v734 = vpop.permute.xlu0 %733
  %735 = vrot.lane.b32.xlu0 %v55, 104
  %v736 = vpop.permute.xlu0 %735
  %737 = vrot.lane.b32.xlu0 %v56, 104
  %v738 = vpop.permute.xlu0 %737
  %739 = vrot.lane.b32.xlu0 %v57, 104
  %v740 = vpop.permute.xlu0 %739
  %741 = vrot.lane.b32.xlu0 %v58, 104
  %v742 = vpop.permute.xlu0 %741
  %743 = vrot.lane.b32.xlu0 %v59, 104
  %v744 = vpop.permute.xlu0 %743
  %745 = vrot.lane.b32.xlu0 %v60, 104
  %v746 = vpop.permute.xlu0 %745
  %747 = vrot.lane.b32.xlu0 %v61, 104
  %v748 = vpop.permute.xlu0 %747
  %749 = vrot.lane.b32.xlu0 %v62, 104
  %v750 = vpop.permute.xlu0 %749
  %vm767 = vcmask 64512
  %v768 = vsel %vm767, %v703, %v720
  %v769 = vsel %vm767, %v704, %v722
  %v770 = vsel %vm767, %v705, %v724
  %v771 = vsel %vm767, %v706, %v726
  %v772 = vsel %vm767, %v707, %v728
  %v773 = vsel %vm767, %v708, %v730
  %v774 = vsel %vm767, %v709, %v732
  %v775 = vsel %vm767, %v710, %v734
  %v776 = vsel %vm767, %v711, %v736
  %v777 = vsel %vm767, %v712, %v738
  %v778 = vsel %vm767, %v713, %v740
  %v779 = vsel %vm767, %v714, %v742
  %v780 = vsel %vm767, %v715, %v744
  %v781 = vsel %vm767, %v716, %v746
  %v782 = vsel %vm767, %v717, %v748
  %v783 = vsel %vm767, %v718, %v750
  %v784 = vsel %vm767, %v433, %v720
  %v785 = vsel %vm767, %v438, %v722
  %v786 = vsel %vm767, %v443, %v724
  %v787 = vsel %vm767, %v448, %v726
  %v788 = vsel %vm767, %v453, %v728
  %v789 = vsel %vm767, %v458, %v730
  %v790 = vsel %vm767, %v463, %v732
  %v791 = vsel %vm767, %v468, %v734
  %v792 = vsel %vm767, %v473, %v736
  %v793 = vsel %vm767, %v478, %v738
  %v794 = vsel %vm767, %v483, %v740
  %v795 = vsel %vm767, %v488, %v742
  %v796 = vsel %vm767, %v493, %v744
  %v797 = vsel %vm767, %v498, %v746
  %v798 = vsel %vm767, %v503, %v748
  %v799 = vsel %vm767, %v508, %v750
  %v800 = vld [vmem:[%s6] sm:$0xff]
  %v801 = vld [vmem:[%s6 + $0x8] sm:$0xff]
  %v802 = vld [vmem:[%s6 + $0x10] sm:$0xff]
  %v803 = vld [vmem:[%s7] sm:$0x1]
  %v805 = vlaneseq
  %v806 = vshrl.u32 %v805, 7
  %v807 = vsub.s32 0, %v806
  %v808 = vrot.slane %v803, %v807
  %vm810 = vcmask 195584
  %v812 = vsel %vm810, %v768, 0
  %v815 = vsel %vm810, %v769, 0
  %v818 = vsel %vm810, %v770, 0
  %v821 = vsel %vm810, %v771, 0
  %v824 = vsel %vm810, %v772, 0
  %v827 = vsel %vm810, %v773, 0
  %v830 = vsel %vm810, %v774, 0
  %v833 = vsel %vm810, %v775, 0
  %v836 = vsel %vm810, %v776, 0
  %v839 = vsel %vm810, %v777, 0
  %v842 = vsel %vm810, %v778, 0
  %v845 = vsel %vm810, %v779, 0
  %v848 = vsel %vm810, %v780, 0
  %v851 = vsel %vm810, %v781, 0
  %v854 = vsel %vm810, %v782, 0
  %v857 = vsel %vm810, %v783, 0
  %v860 = vsel %vm810, %v784, 0
  %v863 = vsel %vm810, %v785, 0
  %v866 = vsel %vm810, %v786, 0
  %v869 = vsel %vm810, %v787, 0
  %v872 = vsel %vm810, %v788, 0
  %v875 = vsel %vm810, %v789, 0
  %v878 = vsel %vm810, %v790, 0
  %v881 = vsel %vm810, %v791, 0
  %v884 = vsel %vm810, %v792, 0
  %v887 = vsel %vm810, %v793, 0
  %v890 = vsel %vm810, %v794, 0
  %v893 = vsel %vm810, %v795, 0
  %v896 = vsel %vm810, %v796, 0
  %v899 = vsel %vm810, %v797, 0
  %v902 = vsel %vm810, %v798, 0
  %v905 = vsel %vm810, %v799, 0
  %907 = vmatprep.subr.mxu0 0.0
  %908 = vmatpush1.msra.mxu0 %v800
  %909 = vmatprep.subr.mxu0 0.0
  %910 = vmatpush1.msra.mxu0 %v801
  %911 = vmatprep.subr.mxu0 0.0
  %912 = vmatpush1.msra.mxu0 %v802
  %913 = vmatprep.subr.mxu0 0.0
  %914 = vmatpush1.msra.mxu0 0.0
  %915 = vmatprep.subr.mxu0 0.0
  %916 = vmatpush1.msra.mxu0 0.0
  %917 = vmatprep.subr.mxu0 0.0
  %918 = vmatpush1.msra.mxu0 0.0
  %919 = vmatprep.subr.mxu0 0.0
  %920 = vmatpush1.msra.mxu0 0.0
  %921 = vmatprep.subr.mxu0 0.0
  %922 = vmatpush1.msra.mxu0 0.0
  %923 = vmatprep.subr.mxu0 0.0
  %924 = vmatpush1.msra.mxu0 0.0
  %925 = vmatprep.subr.mxu0 0.0
  %926 = vmatpush1.msra.mxu0 0.0
  %927 = vmatprep.subr.mxu0 0.0
  %928 = vmatpush1.msra.mxu0 0.0
  %929 = vmatprep.subr.mxu0 0.0
  %930 = vmatpush1.msra.mxu0 0.0
  %931 = vmatprep.subr.mxu0 0.0
  %932 = vmatpush1.msra.mxu0 0.0
  %933 = vmatprep.subr.mxu0 0.0
  %934 = vmatpush1.msra.mxu0 0.0
  %935 = vmatprep.subr.mxu0 0.0
  %936 = vmatpush1.msra.mxu0 0.0
  %937 = vmatprep.subr.mxu0 0.0
  %938 = vmatpush1.msra.mxu0 0.0
  %939 = vmatprep.subr.mxu0 0.0
  %940 = vmatpush1.msra.mxu0 0.0
  %941 = vmatprep.subr.mxu0 0.0
  %942 = vmatpush1.msra.mxu0 0.0
  %943 = vmatprep.subr.mxu0 0.0
  %944 = vmatpush1.msra.mxu0 0.0
  %945 = vmatprep.subr.mxu0 0.0
  %946 = vmatpush1.msra.mxu0 0.0
  %947 = vmatprep.subr.mxu0 0.0
  %948 = vmatpush1.msra.mxu0 0.0
  %949 = vmatprep.subr.mxu0 0.0
  %950 = vmatpush1.msra.mxu0 0.0
  %951 = vmatprep.subr.mxu0 0.0
  %952 = vmatpush1.msra.mxu0 0.0
  %953 = vmatprep.subr.mxu0 0.0
  %954 = vmatpush1.msra.mxu0 0.0
  %955 = vmatprep.subr.mxu0 0.0
  %956 = vmatpush1.msra.mxu0 0.0
  %957 = vmatprep.subr.mxu0 0.0
  %958 = vmatpush1.msra.mxu0 0.0
  %959 = vmatprep.subr.mxu0 0.0
  %960 = vmatpush1.msra.mxu0 0.0
  %961 = vmatprep.subr.mxu0 0.0
  %962 = vmatpush1.msra.mxu0 0.0
  %963 = vmatprep.subr.mxu0 0.0
  %964 = vmatpush1.msra.mxu0 0.0
  %965 = vmatprep.subr.mxu0 0.0
  %966 = vmatpush1.msra.mxu0 0.0
  %967 = vmatprep.subr.mxu0 0.0
  %968 = vmatpush1.msra.mxu0 0.0
  %969 = vmatprep.subr.mxu0 0.0
  %970 = vmatpush1.msra.mxu0 0.0
  %971 = vmatprep.mubr.f32.mxu0 0.0
  %972 = vmatmul.mubr.f32.gmra.mrb[0].mxu0 %v812
  %v973 = vpop.f32.mrb[0].mxu0
  %v974 = vadd.f32 %v808, %v973
  %v975 = vpop.f32.mrb[0].mxu0
  %976 = vmatprep.mubr.f32.mxu0 0.0
  %977 = vmatmul.mubr.f32.gmra.mrb[0].mxu0 %v815
  %v978 = vpop.f32.mrb[0].mxu0
  %v979 = vadd.f32 %v808, %v978
  %v980 = vpop.f32.mrb[0].mxu0
  %981 = vmatprep.mubr.f32.mxu0 0.0
  %982 = vmatmul.mubr.f32.gmra.mrb[0].mxu0 %v818
  %v983 = vpop.f32.mrb[0].mxu0
  %v984 = vadd.f32 %v808, %v983
  %v985 = vpop.f32.mrb[0].mxu0
  %986 = vmatprep.mubr.f32.mxu0 0.0
  %987 = vmatmul.mubr.f32.gmra.mrb[0].mxu0 %v821
  %v988 = vpop.f32.mrb[0].mxu0
  %v989 = vadd.f32 %v808, %v988
  %v990 = vpop.f32.mrb[0].mxu0
  %991 = vmatprep.mubr.f32.mxu0 0.0
  %992 = vmatmul.mubr.f32.gmra.mrb[0].mxu0 %v824
  %v993 = vpop.f32.mrb[0].mxu0
  %v994 = vadd.f32 %v808, %v993
  %v995 = vpop.f32.mrb[0].mxu0
  %996 = vmatprep.mubr.f32.mxu0 0.0
  %997 = vmatmul.mubr.f32.gmra.mrb[0].mxu0 %v827
  %v998 = vpop.f32.mrb[0].mxu0
  %v999 = vadd.f32 %v808, %v998
  %v1000 = vpop.f32.mrb[0].mxu0
  %1001 = vmatprep.mubr.f32.mxu0 0.0
  %1002 = vmatmul.mubr.f32.gmra.mrb[0].mxu0 %v830
  %v1003 = vpop.f32.mrb[0].mxu0
  %v1004 = vadd.f32 %v808, %v1003
  %v1005 = vpop.f32.mrb[0].mxu0
  %1006 = vmatprep.mubr.f32.mxu0 0.0
  %1007 = vmatmul.mubr.f32.gmra.mrb[0].mxu0 %v833
  %v1008 = vpop.f32.mrb[0].mxu0
  %v1009 = vadd.f32 %v808, %v1008
  %v1010 = vpop.f32.mrb[0].mxu0
  %1011 = vmatprep.mubr.f32.mxu0 0.0
  %1012 = vmatmul.mubr.f32.gmra.mrb[0].mxu0 %v836
  %v1013 = vpop.f32.mrb[0].mxu0
  %v1014 = vadd.f32 %v808, %v1013
  %v1015 = vpop.f32.mrb[0].mxu0
  %1016 = vmatprep.mubr.f32.mxu0 0.0
  %1017 = vmatmul.mubr.f32.gmra.mrb[0].mxu0 %v839
  %v1018 = vpop.f32.mrb[0].mxu0
  %v1019 = vadd.f32 %v808, %v1018
  %v1020 = vpop.f32.mrb[0].mxu0
  %1021 = vmatprep.mubr.f32.mxu0 0.0
  %1022 = vmatmul.mubr.f32.gmra.mrb[0].mxu0 %v842
  %v1023 = vpop.f32.mrb[0].mxu0
  %v1024 = vadd.f32 %v808, %v1023
  %v1025 = vpop.f32.mrb[0].mxu0
  %1026 = vmatprep.mubr.f32.mxu0 0.0
  %1027 = vmatmul.mubr.f32.gmra.mrb[0].mxu0 %v845
  %v1028 = vpop.f32.mrb[0].mxu0
  %v1029 = vadd.f32 %v808, %v1028
  %v1030 = vpop.f32.mrb[0].mxu0
  %1031 = vmatprep.mubr.f32.mxu0 0.0
  %1032 = vmatmul.mubr.f32.gmra.mrb[0].mxu0 %v848
  %v1033 = vpop.f32.mrb[0].mxu0
  %v1034 = vadd.f32 %v808, %v1033
  %v1035 = vpop.f32.mrb[0].mxu0
  %1036 = vmatprep.mubr.f32.mxu0 0.0
  %1037 = vmatmul.mubr.f32.gmra.mrb[0].mxu0 %v851
  %v1038 = vpop.f32.mrb[0].mxu0
  %v1039 = vadd.f32 %v808, %v1038
  %v1040 = vpop.f32.mrb[0].mxu0
  %1041 = vmatprep.mubr.f32.mxu0 0.0
  %1042 = vmatmul.mubr.f32.gmra.mrb[0].mxu0 %v854
  %v1043 = vpop.f32.mrb[0].mxu0
  %v1044 = vadd.f32 %v808, %v1043
  %v1045 = vpop.f32.mrb[0].mxu0
  %1046 = vmatprep.mubr.f32.mxu0 0.0
  %1047 = vmatmul.mubr.f32.gmra.mrb[0].mxu0 %v857
  %v1048 = vpop.f32.mrb[0].mxu0
  %v1049 = vadd.f32 %v808, %v1048
  %v1050 = vpop.f32.mrb[0].mxu0
  %1051 = vmatprep.mubr.f32.mxu0 0.0
  %1052 = vmatmul.mubr.f32.gmra.mrb[0].mxu0 %v860
  %v1053 = vpop.f32.mrb[0].mxu0
  %v1054 = vadd.f32 %v808, %v1053
  %v1055 = vpop.f32.mrb[0].mxu0
  %1056 = vmatprep.mubr.f32.mxu0 0.0
  %1057 = vmatmul.mubr.f32.gmra.mrb[0].mxu0 %v863
  %v1058 = vpop.f32.mrb[0].mxu0
  %v1059 = vadd.f32 %v808, %v1058
  %v1060 = vpop.f32.mrb[0].mxu0
  %1061 = vmatprep.mubr.f32.mxu0 0.0
  %1062 = vmatmul.mubr.f32.gmra.mrb[0].mxu0 %v866
  %v1063 = vpop.f32.mrb[0].mxu0
  %v1064 = vadd.f32 %v808, %v1063
  %v1065 = vpop.f32.mrb[0].mxu0
  %1066 = vmatprep.mubr.f32.mxu0 0.0
  %1067 = vmatmul.mubr.f32.gmra.mrb[0].mxu0 %v869
  %v1068 = vpop.f32.mrb[0].mxu0
  %v1069 = vadd.f32 %v808, %v1068
  %v1070 = vpop.f32.mrb[0].mxu0
  %1071 = vmatprep.mubr.f32.mxu0 0.0
  %1072 = vmatmul.mubr.f32.gmra.mrb[0].mxu0 %v872
  %v1073 = vpop.f32.mrb[0].mxu0
  %v1074 = vadd.f32 %v808, %v1073
  %v1075 = vpop.f32.mrb[0].mxu0
  %1076 = vmatprep.mubr.f32.mxu0 0.0
  %1077 = vmatmul.mubr.f32.gmra.mrb[0].mxu0 %v875
  %v1078 = vpop.f32.mrb[0].mxu0
  %v1079 = vadd.f32 %v808, %v1078
  %v1080 = vpop.f32.mrb[0].mxu0
  %1081 = vmatprep.mubr.f32.mxu0 0.0
  %1082 = vmatmul.mubr.f32.gmra.mrb[0].mxu0 %v878
  %v1083 = vpop.f32.mrb[0].mxu0
  %v1084 = vadd.f32 %v808, %v1083
  %v1085 = vpop.f32.mrb[0].mxu0
  %1086 = vmatprep.mubr.f32.mxu0 0.0
  %1087 = vmatmul.mubr.f32.gmra.mrb[0].mxu0 %v881
  %v1088 = vpop.f32.mrb[0].mxu0
  %v1089 = vadd.f32 %v808, %v1088
  %v1090 = vpop.f32.mrb[0].mxu0
  %1091 = vmatprep.mubr.f32.mxu0 0.0
  %1092 = vmatmul.mubr.f32.gmra.mrb[0].mxu0 %v884
  %v1093 = vpop.f32.mrb[0].mxu0
  %v1094 = vadd.f32 %v808, %v1093
  %v1095 = vpop.f32.mrb[0].mxu0
  %1096 = vmatprep.mubr.f32.mxu0 0.0
  %1097 = vmatmul.mubr.f32.gmra.mrb[0].mxu0 %v887
  %v1098 = vpop.f32.mrb[0].mxu0
  %v1099 = vadd.f32 %v808, %v1098
  %v1100 = vpop.f32.mrb[0].mxu0
  %1101 = vmatprep.mubr.f32.mxu0 0.0
  %1102 = vmatmul.mubr.f32.gmra.mrb[0].mxu0 %v890
  %v1103 = vpop.f32.mrb[0].mxu0
  %v1104 = vadd.f32 %v808, %v1103
  %v1105 = vpop.f32.mrb[0].mxu0
  %1106 = vmatprep.mubr.f32.mxu0 0.0
  %1107 = vmatmul.mubr.f32.gmra.mrb[0].mxu0 %v893
  %v1108 = vpop.f32.mrb[0].mxu0
  %v1109 = vadd.f32 %v808, %v1108
  %v1110 = vpop.f32.mrb[0].mxu0
  %1111 = vmatprep.mubr.f32.mxu0 0.0
  %1112 = vmatmul.mubr.f32.gmra.mrb[0].mxu0 %v896
  %v1113 = vpop.f32.mrb[0].mxu0
  %v1114 = vadd.f32 %v808, %v1113
  %v1115 = vpop.f32.mrb[0].mxu0
  %1116 = vmatprep.mubr.f32.mxu0 0.0
  %1117 = vmatmul.mubr.f32.gmra.mrb[0].mxu0 %v899
  %v1118 = vpop.f32.mrb[0].mxu0
  %v1119 = vadd.f32 %v808, %v1118
  %v1120 = vpop.f32.mrb[0].mxu0
  %1121 = vmatprep.mubr.f32.mxu0 0.0
  %1122 = vmatmul.mubr.f32.gmra.mrb[0].mxu0 %v902
  %v1123 = vpop.f32.mrb[0].mxu0
  %v1124 = vadd.f32 %v808, %v1123
  %v1125 = vpop.f32.mrb[0].mxu0
  %1126 = vmatprep.mubr.f32.mxu0 0.0
  %1127 = vmatmul.mubr.f32.gmra.mrb[0].mxu0 %v905
  %v1128 = vpop.f32.mrb[0].mxu0
  %v1129 = vadd.f32 %v808, %v1128
  %v1130 = vpop.f32.mrb[0].mxu0
  %1131 = vdwg.mxu0
  %v1132 = vmax.f32 %v974, 0.0
  %v1133 = vmax.f32 %v979, 0.0
  %v1134 = vmax.f32 %v984, 0.0
  %v1135 = vmax.f32 %v989, 0.0
  %v1136 = vmax.f32 %v994, 0.0
  %v1137 = vmax.f32 %v999, 0.0
  %v1138 = vmax.f32 %v1004, 0.0
  %v1139 = vmax.f32 %v1009, 0.0
  %v1140 = vmax.f32 %v1014, 0.0
  %v1141 = vmax.f32 %v1019, 0.0
  %v1142 = vmax.f32 %v1024, 0.0
  %v1143 = vmax.f32 %v1029, 0.0
  %v1144 = vmax.f32 %v1034, 0.0
  %v1145 = vmax.f32 %v1039, 0.0
  %v1146 = vmax.f32 %v1044, 0.0
  %v1147 = vmax.f32 %v1049, 0.0
  %v1148 = vmax.f32 %v1054, 0.0
  %v1149 = vmax.f32 %v1059, 0.0
  %v1150 = vmax.f32 %v1064, 0.0
  %v1151 = vmax.f32 %v1069, 0.0
  %v1152 = vmax.f32 %v1074, 0.0
  %v1153 = vmax.f32 %v1079, 0.0
  %v1154 = vmax.f32 %v1084, 0.0
  %v1155 = vmax.f32 %v1089, 0.0
  %v1156 = vmax.f32 %v1094, 0.0
  %v1157 = vmax.f32 %v1099, 0.0
  %v1158 = vmax.f32 %v1104, 0.0
  %v1159 = vmax.f32 %v1109, 0.0
  %v1160 = vmax.f32 %v1114, 0.0
  %v1161 = vmax.f32 %v1119, 0.0
  %v1162 = vmax.f32 %v1124, 0.0
  %v1163 = vmax.f32 %v1129, 0.0
  %v1164 = vld [vmem:[%s8] sm:$0xff]
  %v1165 = vld [vmem:[%s8 + $0x8] sm:$0xff]
  %v1166 = vld [vmem:[%s8 + $0x10] sm:$0xff]
  %v1167 = vld [vmem:[%s8 + $0x18] sm:$0xff]
  %v1168 = vld [vmem:[%s8 + $0x20] sm:$0xff]
  %v1169 = vld [vmem:[%s8 + $0x28] sm:$0xff]
  %v1170 = vld [vmem:[%s8 + $0x30] sm:$0xff]
  %v1171 = vld [vmem:[%s8 + $0x38] sm:$0xff]
  %v1172 = vld [vmem:[%s9] sm:$0x1]
  %v1174 = vlaneseq
  %v1175 = vshrl.u32 %v1174, 7
  %v1176 = vsub.s32 0, %v1175
  %v1177 = vrot.slane %v1172, %v1176
  %v1180 = vsel %vm317, %v1132, 0
  %v1183 = vsel %vm317, %v1133, 0
  %v1186 = vsel %vm317, %v1134, 0
  %v1189 = vsel %vm317, %v1135, 0
  %v1192 = vsel %vm317, %v1136, 0
  %v1195 = vsel %vm317, %v1137, 0
  %v1198 = vsel %vm317, %v1138, 0
  %v1201 = vsel %vm317, %v1139, 0
  %v1204 = vsel %vm317, %v1140, 0
  %v1207 = vsel %vm317, %v1141, 0
  %v1210 = vsel %vm317, %v1142, 0
  %v1213 = vsel %vm317, %v1143, 0
  %v1216 = vsel %vm317, %v1144, 0
  %v1219 = vsel %vm317, %v1145, 0
  %v1222 = vsel %vm317, %v1146, 0
  %v1225 = vsel %vm317, %v1147, 0
  %v1228 = vsel %vm317, %v1148, 0
  %v1231 = vsel %vm317, %v1149, 0
  %v1234 = vsel %vm317, %v1150, 0
  %v1237 = vsel %vm317, %v1151, 0
  %v1240 = vsel %vm317, %v1152, 0
  %v1243 = vsel %vm317, %v1153, 0
  %v1246 = vsel %vm317, %v1154, 0
  %v1249 = vsel %vm317, %v1155, 0
  %v1252 = vsel %vm317, %v1156, 0
  %v1255 = vsel %vm317, %v1157, 0
  %v1258 = vsel %vm317, %v1158, 0
  %v1261 = vsel %vm317, %v1159, 0
  %v1264 = vsel %vm317, %v1160, 0
  %v1267 = vsel %vm317, %v1161, 0
  %v1270 = vsel %vm317, %v1162, 0
  %v1273 = vsel %vm317, %v1163, 0
  %1275 = vmatprep.subr.mxu0 0.0
  %1276 = vmatpush1.msra.mxu0 %v1164
  %1277 = vmatprep.subr.mxu0 0.0
  %1278 = vmatpush1.msra.mxu0 %v1165
  %1279 = vmatprep.subr.mxu0 0.0
  %1280 = vmatpush1.msra.mxu0 %v1166
  %1281 = vmatprep.subr.mxu0 0.0
  %1282 = vmatpush1.msra.mxu0 %v1167
  %1283 = vmatprep.subr.mxu0 0.0
  %1284 = vmatpush1.msra.mxu0 %v1168
  %1285 = vmatprep.subr.mxu0 0.0
  %1286 = vmatpush1.msra.mxu0 %v1169
  %1287 = vmatprep.subr.mxu0 0.0
  %1288 = vmatpush1.msra.mxu0 %v1170
  %1289 = vmatprep.subr.mxu0 0.0
  %1290 = vmatpush1.msra.mxu0 %v1171
  %1291 = vmatprep.subr.mxu0 0.0
  %1292 = vmatpush1.msra.mxu0 0.0
  %1293 = vmatprep.subr.mxu0 0.0
  %1294 = vmatpush1.msra.mxu0 0.0
  %1295 = vmatprep.subr.mxu0 0.0
  %1296 = vmatpush1.msra.mxu0 0.0
  %1297 = vmatprep.subr.mxu0 0.0
  %1298 = vmatpush1.msra.mxu0 0.0
  %1299 = vmatprep.subr.mxu0 0.0
  %1300 = vmatpush1.msra.mxu0 0.0
  %1301 = vmatprep.subr.mxu0 0.0
  %1302 = vmatpush1.msra.mxu0 0.0
  %1303 = vmatprep.subr.mxu0 0.0
  %1304 = vmatpush1.msra.mxu0 0.0
  %1305 = vmatprep.subr.mxu0 0.0
  %1306 = vmatpush1.msra.mxu0 0.0
  %1307 = vmatprep.subr.mxu0 0.0
  %1308 = vmatpush1.msra.mxu0 0.0
  %1309 = vmatprep.subr.mxu0 0.0
  %1310 = vmatpush1.msra.mxu0 0.0
  %1311 = vmatprep.subr.mxu0 0.0
  %1312 = vmatpush1.msra.mxu0 0.0
  %1313 = vmatprep.subr.mxu0 0.0
  %1314 = vmatpush1.msra.mxu0 0.0
  %1315 = vmatprep.subr.mxu0 0.0
  %1316 = vmatpush1.msra.mxu0 0.0
  %1317 = vmatprep.subr.mxu0 0.0
  %1318 = vmatpush1.msra.mxu0 0.0
  %1319 = vmatprep.subr.mxu0 0.0
  %1320 = vmatpush1.msra.mxu0 0.0
  %1321 = vmatprep.subr.mxu0 0.0
  %1322 = vmatpush1.msra.mxu0 0.0
  %1323 = vmatprep.subr.mxu0 0.0
  %1324 = vmatpush1.msra.mxu0 0.0
  %1325 = vmatprep.subr.mxu0 0.0
  %1326 = vmatpush1.msra.mxu0 0.0
  %1327 = vmatprep.subr.mxu0 0.0
  %1328 = vmatpush1.msra.mxu0 0.0
  %1329 = vmatprep.subr.mxu0 0.0
  %1330 = vmatpush1.msra.mxu0 0.0
  %1331 = vmatprep.subr.mxu0 0.0
  %1332 = vmatpush1.msra.mxu0 0.0
  %1333 = vmatprep.subr.mxu0 0.0
  %1334 = vmatpush1.msra.mxu0 0.0
  %1335 = vmatprep.subr.mxu0 0.0
  %1336 = vmatpush1.msra.mxu0 0.0
  %1337 = vmatprep.subr.mxu0 0.0
  %1338 = vmatpush1.msra.mxu0 0.0
  %1339 = vmatprep.mubr.f32.mxu0 0.0
  %1340 = vmatmul.mubr.f32.gmra.mrb[0].mxu0 %v1180
  %v1341 = vpop.f32.mrb[0].mxu0
  %v1342 = vadd.f32 %v1177, %v1341
  %v1343 = vpop.f32.mrb[0].mxu0
  %1344 = vmatprep.mubr.f32.mxu0 0.0
  %1345 = vmatmul.mubr.f32.gmra.mrb[0].mxu0 %v1183
  %v1346 = vpop.f32.mrb[0].mxu0
  %v1347 = vadd.f32 %v1177, %v1346
  %v1348 = vpop.f32.mrb[0].mxu0
  %1349 = vmatprep.mubr.f32.mxu0 0.0
  %1350 = vmatmul.mubr.f32.gmra.mrb[0].mxu0 %v1186
  %v1351 = vpop.f32.mrb[0].mxu0
  %v1352 = vadd.f32 %v1177, %v1351
  %v1353 = vpop.f32.mrb[0].mxu0
  %1354 = vmatprep.mubr.f32.mxu0 0.0
  %1355 = vmatmul.mubr.f32.gmra.mrb[0].mxu0 %v1189
  %v1356 = vpop.f32.mrb[0].mxu0
  %v1357 = vadd.f32 %v1177, %v1356
  %v1358 = vpop.f32.mrb[0].mxu0
  %1359 = vmatprep.mubr.f32.mxu0 0.0
  %1360 = vmatmul.mubr.f32.gmra.mrb[0].mxu0 %v1192
  %v1361 = vpop.f32.mrb[0].mxu0
  %v1362 = vadd.f32 %v1177, %v1361
  %v1363 = vpop.f32.mrb[0].mxu0
  %1364 = vmatprep.mubr.f32.mxu0 0.0
  %1365 = vmatmul.mubr.f32.gmra.mrb[0].mxu0 %v1195
  %v1366 = vpop.f32.mrb[0].mxu0
  %v1367 = vadd.f32 %v1177, %v1366
  %v1368 = vpop.f32.mrb[0].mxu0
  %1369 = vmatprep.mubr.f32.mxu0 0.0
  %1370 = vmatmul.mubr.f32.gmra.mrb[0].mxu0 %v1198
  %v1371 = vpop.f32.mrb[0].mxu0
  %v1372 = vadd.f32 %v1177, %v1371
  %v1373 = vpop.f32.mrb[0].mxu0
  %1374 = vmatprep.mubr.f32.mxu0 0.0
  %1375 = vmatmul.mubr.f32.gmra.mrb[0].mxu0 %v1201
  %v1376 = vpop.f32.mrb[0].mxu0
  %v1377 = vadd.f32 %v1177, %v1376
  %v1378 = vpop.f32.mrb[0].mxu0
  %1379 = vmatprep.mubr.f32.mxu0 0.0
  %1380 = vmatmul.mubr.f32.gmra.mrb[0].mxu0 %v1204
  %v1381 = vpop.f32.mrb[0].mxu0
  %v1382 = vadd.f32 %v1177, %v1381
  %v1383 = vpop.f32.mrb[0].mxu0
  %1384 = vmatprep.mubr.f32.mxu0 0.0
  %1385 = vmatmul.mubr.f32.gmra.mrb[0].mxu0 %v1207
  %v1386 = vpop.f32.mrb[0].mxu0
  %v1387 = vadd.f32 %v1177, %v1386
  %v1388 = vpop.f32.mrb[0].mxu0
  %1389 = vmatprep.mubr.f32.mxu0 0.0
  %1390 = vmatmul.mubr.f32.gmra.mrb[0].mxu0 %v1210
  %v1391 = vpop.f32.mrb[0].mxu0
  %v1392 = vadd.f32 %v1177, %v1391
  %v1393 = vpop.f32.mrb[0].mxu0
  %1394 = vmatprep.mubr.f32.mxu0 0.0
  %1395 = vmatmul.mubr.f32.gmra.mrb[0].mxu0 %v1213
  %v1396 = vpop.f32.mrb[0].mxu0
  %v1397 = vadd.f32 %v1177, %v1396
  %v1398 = vpop.f32.mrb[0].mxu0
  %1399 = vmatprep.mubr.f32.mxu0 0.0
  %1400 = vmatmul.mubr.f32.gmra.mrb[0].mxu0 %v1216
  %v1401 = vpop.f32.mrb[0].mxu0
  %v1402 = vadd.f32 %v1177, %v1401
  %v1403 = vpop.f32.mrb[0].mxu0
  %1404 = vmatprep.mubr.f32.mxu0 0.0
  %1405 = vmatmul.mubr.f32.gmra.mrb[0].mxu0 %v1219
  %v1406 = vpop.f32.mrb[0].mxu0
  %v1407 = vadd.f32 %v1177, %v1406
  %v1408 = vpop.f32.mrb[0].mxu0
  %1409 = vmatprep.mubr.f32.mxu0 0.0
  %1410 = vmatmul.mubr.f32.gmra.mrb[0].mxu0 %v1222
  %v1411 = vpop.f32.mrb[0].mxu0
  %v1412 = vadd.f32 %v1177, %v1411
  %v1413 = vpop.f32.mrb[0].mxu0
  %1414 = vmatprep.mubr.f32.mxu0 0.0
  %1415 = vmatmul.mubr.f32.gmra.mrb[0].mxu0 %v1225
  %v1416 = vpop.f32.mrb[0].mxu0
  %v1417 = vadd.f32 %v1177, %v1416
  %v1418 = vpop.f32.mrb[0].mxu0
  %1419 = vmatprep.mubr.f32.mxu0 0.0
  %1420 = vmatmul.mubr.f32.gmra.mrb[0].mxu0 %v1228
  %v1421 = vpop.f32.mrb[0].mxu0
  %v1422 = vadd.f32 %v1177, %v1421
  %v1423 = vpop.f32.mrb[0].mxu0
  %1424 = vmatprep.mubr.f32.mxu0 0.0
  %1425 = vmatmul.mubr.f32.gmra.mrb[0].mxu0 %v1231
  %v1426 = vpop.f32.mrb[0].mxu0
  %v1427 = vadd.f32 %v1177, %v1426
  %v1428 = vpop.f32.mrb[0].mxu0
  %1429 = vmatprep.mubr.f32.mxu0 0.0
  %1430 = vmatmul.mubr.f32.gmra.mrb[0].mxu0 %v1234
  %v1431 = vpop.f32.mrb[0].mxu0
  %v1432 = vadd.f32 %v1177, %v1431
  %v1433 = vpop.f32.mrb[0].mxu0
  %1434 = vmatprep.mubr.f32.mxu0 0.0
  %1435 = vmatmul.mubr.f32.gmra.mrb[0].mxu0 %v1237
  %v1436 = vpop.f32.mrb[0].mxu0
  %v1437 = vadd.f32 %v1177, %v1436
  %v1438 = vpop.f32.mrb[0].mxu0
  %1439 = vmatprep.mubr.f32.mxu0 0.0
  %1440 = vmatmul.mubr.f32.gmra.mrb[0].mxu0 %v1240
  %v1441 = vpop.f32.mrb[0].mxu0
  %v1442 = vadd.f32 %v1177, %v1441
  %v1443 = vpop.f32.mrb[0].mxu0
  %1444 = vmatprep.mubr.f32.mxu0 0.0
  %1445 = vmatmul.mubr.f32.gmra.mrb[0].mxu0 %v1243
  %v1446 = vpop.f32.mrb[0].mxu0
  %v1447 = vadd.f32 %v1177, %v1446
  %v1448 = vpop.f32.mrb[0].mxu0
  %1449 = vmatprep.mubr.f32.mxu0 0.0
  %1450 = vmatmul.mubr.f32.gmra.mrb[0].mxu0 %v1246
  %v1451 = vpop.f32.mrb[0].mxu0
  %v1452 = vadd.f32 %v1177, %v1451
  %v1453 = vpop.f32.mrb[0].mxu0
  %1454 = vmatprep.mubr.f32.mxu0 0.0
  %1455 = vmatmul.mubr.f32.gmra.mrb[0].mxu0 %v1249
  %v1456 = vpop.f32.mrb[0].mxu0
  %v1457 = vadd.f32 %v1177, %v1456
  %v1458 = vpop.f32.mrb[0].mxu0
  %1459 = vmatprep.mubr.f32.mxu0 0.0
  %1460 = vmatmul.mubr.f32.gmra.mrb[0].mxu0 %v1252
  %v1461 = vpop.f32.mrb[0].mxu0
  %v1462 = vadd.f32 %v1177, %v1461
  %v1463 = vpop.f32.mrb[0].mxu0
  %1464 = vmatprep.mubr.f32.mxu0 0.0
  %1465 = vmatmul.mubr.f32.gmra.mrb[0].mxu0 %v1255
  %v1466 = vpop.f32.mrb[0].mxu0
  %v1467 = vadd.f32 %v1177, %v1466
  %v1468 = vpop.f32.mrb[0].mxu0
  %1469 = vmatprep.mubr.f32.mxu0 0.0
  %1470 = vmatmul.mubr.f32.gmra.mrb[0].mxu0 %v1258
  %v1471 = vpop.f32.mrb[0].mxu0
  %v1472 = vadd.f32 %v1177, %v1471
  %v1473 = vpop.f32.mrb[0].mxu0
  %1474 = vmatprep.mubr.f32.mxu0 0.0
  %1475 = vmatmul.mubr.f32.gmra.mrb[0].mxu0 %v1261
  %v1476 = vpop.f32.mrb[0].mxu0
  %v1477 = vadd.f32 %v1177, %v1476
  %v1478 = vpop.f32.mrb[0].mxu0
  %1479 = vmatprep.mubr.f32.mxu0 0.0
  %1480 = vmatmul.mubr.f32.gmra.mrb[0].mxu0 %v1264
  %v1481 = vpop.f32.mrb[0].mxu0
  %v1482 = vadd.f32 %v1177, %v1481
  %v1483 = vpop.f32.mrb[0].mxu0
  %1484 = vmatprep.mubr.f32.mxu0 0.0
  %1485 = vmatmul.mubr.f32.gmra.mrb[0].mxu0 %v1267
  %v1486 = vpop.f32.mrb[0].mxu0
  %v1487 = vadd.f32 %v1177, %v1486
  %v1488 = vpop.f32.mrb[0].mxu0
  %1489 = vmatprep.mubr.f32.mxu0 0.0
  %1490 = vmatmul.mubr.f32.gmra.mrb[0].mxu0 %v1270
  %v1491 = vpop.f32.mrb[0].mxu0
  %v1492 = vadd.f32 %v1177, %v1491
  %v1493 = vpop.f32.mrb[0].mxu0
  %1494 = vmatprep.mubr.f32.mxu0 0.0
  %1495 = vmatmul.mubr.f32.gmra.mrb[0].mxu0 %v1273
  %v1496 = vpop.f32.mrb[0].mxu0
  %v1497 = vadd.f32 %v1177, %v1496
  %v1498 = vpop.f32.mrb[0].mxu0
  %1499 = vdwg.mxu0
  %v1500 = vld [vmem:[%s10] sm:$0xff]
  %v1501 = vld [vmem:[%s10 + $0x8] sm:$0xff]
  %v1502 = vld [vmem:[%s10 + $0x10] sm:$0xff]
  %v1503 = vld [vmem:[%s10 + $0x18] sm:$0xff]
  %v1504 = vld [vmem:[%s10 + $0x20] sm:$0xff]
  %v1505 = vld [vmem:[%s10 + $0x28] sm:$0xff]
  %v1506 = vld [vmem:[%s10 + $0x30] sm:$0xff]
  %v1507 = vld [vmem:[%s10 + $0x38] sm:$0xff]
  %v1508 = vld [vmem:[%s11] sm:$0x1]
  %v1510 = vlaneseq
  %v1511 = vshrl.u32 %v1510, 7
  %v1512 = vsub.s32 0, %v1511
  %v1513 = vrot.slane %v1508, %v1512
  %1515 = vmatprep.subr.mxu0 0.0
  %1516 = vmatpush1.msra.mxu0 %v1500
  %1517 = vmatprep.subr.mxu0 0.0
  %1518 = vmatpush1.msra.mxu0 %v1501
  %1519 = vmatprep.subr.mxu0 0.0
  %1520 = vmatpush1.msra.mxu0 %v1502
  %1521 = vmatprep.subr.mxu0 0.0
  %1522 = vmatpush1.msra.mxu0 %v1503
  %1523 = vmatprep.subr.mxu0 0.0
  %1524 = vmatpush1.msra.mxu0 %v1504
  %1525 = vmatprep.subr.mxu0 0.0
  %1526 = vmatpush1.msra.mxu0 %v1505
  %1527 = vmatprep.subr.mxu0 0.0
  %1528 = vmatpush1.msra.mxu0 %v1506
  %1529 = vmatprep.subr.mxu0 0.0
  %1530 = vmatpush1.msra.mxu0 %v1507
  %1531 = vmatprep.subr.mxu0 0.0
  %1532 = vmatpush1.msra.mxu0 0.0
  %1533 = vmatprep.subr.mxu0 0.0
  %1534 = vmatpush1.msra.mxu0 0.0
  %1535 = vmatprep.subr.mxu0 0.0
  %1536 = vmatpush1.msra.mxu0 0.0
  %1537 = vmatprep.subr.mxu0 0.0
  %1538 = vmatpush1.msra.mxu0 0.0
  %1539 = vmatprep.subr.mxu0 0.0
  %1540 = vmatpush1.msra.mxu0 0.0
  %1541 = vmatprep.subr.mxu0 0.0
  %1542 = vmatpush1.msra.mxu0 0.0
  %1543 = vmatprep.subr.mxu0 0.0
  %1544 = vmatpush1.msra.mxu0 0.0
  %1545 = vmatprep.subr.mxu0 0.0
  %1546 = vmatpush1.msra.mxu0 0.0
  %1547 = vmatprep.subr.mxu0 0.0
  %1548 = vmatpush1.msra.mxu0 0.0
  %1549 = vmatprep.subr.mxu0 0.0
  %1550 = vmatpush1.msra.mxu0 0.0
  %1551 = vmatprep.subr.mxu0 0.0
  %1552 = vmatpush1.msra.mxu0 0.0
  %1553 = vmatprep.subr.mxu0 0.0
  %1554 = vmatpush1.msra.mxu0 0.0
  %1555 = vmatprep.subr.mxu0 0.0
  %1556 = vmatpush1.msra.mxu0 0.0
  %1557 = vmatprep.subr.mxu0 0.0
  %1558 = vmatpush1.msra.mxu0 0.0
  %1559 = vmatprep.subr.mxu0 0.0
  %1560 = vmatpush1.msra.mxu0 0.0
  %1561 = vmatprep.subr.mxu0 0.0
  %1562 = vmatpush1.msra.mxu0 0.0
  %1563 = vmatprep.subr.mxu0 0.0
  %1564 = vmatpush1.msra.mxu0 0.0
  %1565 = vmatprep.subr.mxu0 0.0
  %1566 = vmatpush1.msra.mxu0 0.0
  %1567 = vmatprep.subr.mxu0 0.0
  %1568 = vmatpush1.msra.mxu0 0.0
  %1569 = vmatprep.subr.mxu0 0.0
  %1570 = vmatpush1.msra.mxu0 0.0
  %1571 = vmatprep.subr.mxu0 0.0
  %1572 = vmatpush1.msra.mxu0 0.0
  %1573 = vmatprep.subr.mxu0 0.0
  %1574 = vmatpush1.msra.mxu0 0.0
  %1575 = vmatprep.subr.mxu0 0.0
  %1576 = vmatpush1.msra.mxu0 0.0
  %1577 = vmatprep.subr.mxu0 0.0
  %1578 = vmatpush1.msra.mxu0 0.0
  %1579 = vmatprep.mubr.f32.mxu0 0.0
  %1580 = vmatmul.mubr.f32.gmra.mrb[0].mxu0 %v1228
  %v1581 = vpop.f32.mrb[0].mxu0
  %v1582 = vadd.f32 %v1513, %v1581
  %v1583 = vpop.f32.mrb[0].mxu0
  %1584 = vmatprep.mubr.f32.mxu0 0.0
  %1585 = vmatmul.mubr.f32.gmra.mrb[0].mxu0 %v1231
  %v1586 = vpop.f32.mrb[0].mxu0
  %v1587 = vadd.f32 %v1513, %v1586
  %v1588 = vpop.f32.mrb[0].mxu0
  %1589 = vmatprep.mubr.f32.mxu0 0.0
  %1590 = vmatmul.mubr.f32.gmra.mrb[0].mxu0 %v1234
  %v1591 = vpop.f32.mrb[0].mxu0
  %v1592 = vadd.f32 %v1513, %v1591
  %v1593 = vpop.f32.mrb[0].mxu0
  %1594 = vmatprep.mubr.f32.mxu0 0.0
  %1595 = vmatmul.mubr.f32.gmra.mrb[0].mxu0 %v1237
  %v1596 = vpop.f32.mrb[0].mxu0
  %v1597 = vadd.f32 %v1513, %v1596
  %v1598 = vpop.f32.mrb[0].mxu0
  %1599 = vmatprep.mubr.f32.mxu0 0.0
  %1600 = vmatmul.mubr.f32.gmra.mrb[0].mxu0 %v1240
  %v1601 = vpop.f32.mrb[0].mxu0
  %v1602 = vadd.f32 %v1513, %v1601
  %v1603 = vpop.f32.mrb[0].mxu0
  %1604 = vmatprep.mubr.f32.mxu0 0.0
  %1605 = vmatmul.mubr.f32.gmra.mrb[0].mxu0 %v1243
  %v1606 = vpop.f32.mrb[0].mxu0
  %v1607 = vadd.f32 %v1513, %v1606
  %v1608 = vpop.f32.mrb[0].mxu0
  %1609 = vmatprep.mubr.f32.mxu0 0.0
  %1610 = vmatmul.mubr.f32.gmra.mrb[0].mxu0 %v1246
  %v1611 = vpop.f32.mrb[0].mxu0
  %v1612 = vadd.f32 %v1513, %v1611
  %v1613 = vpop.f32.mrb[0].mxu0
  %1614 = vmatprep.mubr.f32.mxu0 0.0
  %1615 = vmatmul.mubr.f32.gmra.mrb[0].mxu0 %v1249
  %v1616 = vpop.f32.mrb[0].mxu0
  %v1617 = vadd.f32 %v1513, %v1616
  %v1618 = vpop.f32.mrb[0].mxu0
  %1619 = vmatprep.mubr.f32.mxu0 0.0
  %1620 = vmatmul.mubr.f32.gmra.mrb[0].mxu0 %v1252
  %v1621 = vpop.f32.mrb[0].mxu0
  %v1622 = vadd.f32 %v1513, %v1621
  %v1623 = vpop.f32.mrb[0].mxu0
  %1624 = vmatprep.mubr.f32.mxu0 0.0
  %1625 = vmatmul.mubr.f32.gmra.mrb[0].mxu0 %v1255
  %v1626 = vpop.f32.mrb[0].mxu0
  %v1627 = vadd.f32 %v1513, %v1626
  %v1628 = vpop.f32.mrb[0].mxu0
  %1629 = vmatprep.mubr.f32.mxu0 0.0
  %1630 = vmatmul.mubr.f32.gmra.mrb[0].mxu0 %v1258
  %v1631 = vpop.f32.mrb[0].mxu0
  %v1632 = vadd.f32 %v1513, %v1631
  %v1633 = vpop.f32.mrb[0].mxu0
  %1634 = vmatprep.mubr.f32.mxu0 0.0
  %1635 = vmatmul.mubr.f32.gmra.mrb[0].mxu0 %v1261
  %v1636 = vpop.f32.mrb[0].mxu0
  %v1637 = vadd.f32 %v1513, %v1636
  %v1638 = vpop.f32.mrb[0].mxu0
  %1639 = vmatprep.mubr.f32.mxu0 0.0
  %1640 = vmatmul.mubr.f32.gmra.mrb[0].mxu0 %v1264
  %v1641 = vpop.f32.mrb[0].mxu0
  %v1642 = vadd.f32 %v1513, %v1641
  %v1643 = vpop.f32.mrb[0].mxu0
  %1644 = vmatprep.mubr.f32.mxu0 0.0
  %1645 = vmatmul.mubr.f32.gmra.mrb[0].mxu0 %v1267
  %v1646 = vpop.f32.mrb[0].mxu0
  %v1647 = vadd.f32 %v1513, %v1646
  %v1648 = vpop.f32.mrb[0].mxu0
  %1649 = vmatprep.mubr.f32.mxu0 0.0
  %1650 = vmatmul.mubr.f32.gmra.mrb[0].mxu0 %v1270
  %v1651 = vpop.f32.mrb[0].mxu0
  %v1652 = vadd.f32 %v1513, %v1651
  %v1653 = vpop.f32.mrb[0].mxu0
  %1654 = vmatprep.mubr.f32.mxu0 0.0
  %1655 = vmatmul.mubr.f32.gmra.mrb[0].mxu0 %v1273
  %v1656 = vpop.f32.mrb[0].mxu0
  %v1657 = vadd.f32 %v1513, %v1656
  %v1658 = vpop.f32.mrb[0].mxu0
  %1659 = vdwg.mxu0
  %v1660 = vmax.f32 %v1582, 0.0
  %v1661 = vmax.f32 %v1587, 0.0
  %v1662 = vmax.f32 %v1592, 0.0
  %v1663 = vmax.f32 %v1597, 0.0
  %v1664 = vmax.f32 %v1602, 0.0
  %v1665 = vmax.f32 %v1607, 0.0
  %v1666 = vmax.f32 %v1612, 0.0
  %v1667 = vmax.f32 %v1617, 0.0
  %v1668 = vmax.f32 %v1622, 0.0
  %v1669 = vmax.f32 %v1627, 0.0
  %v1670 = vmax.f32 %v1632, 0.0
  %v1671 = vmax.f32 %v1637, 0.0
  %v1672 = vmax.f32 %v1642, 0.0
  %v1673 = vmax.f32 %v1647, 0.0
  %v1674 = vmax.f32 %v1652, 0.0
  %v1675 = vmax.f32 %v1657, 0.0
  %v1676 = vld [vmem:[%s12] sm:$0xff]
  %v1677 = vld [vmem:[%s12 + $0x8] sm:$0xff]
  %v1678 = vld [vmem:[%s12 + $0x10] sm:$0xff]
  %v1679 = vld [vmem:[%s12 + $0x18] sm:$0xff]
  %v1680 = vld [vmem:[%s12 + $0x20] sm:$0xff]
  %v1681 = vld [vmem:[%s12 + $0x28] sm:$0xff]
  %v1682 = vld [vmem:[%s12 + $0x30] sm:$0xff]
  %v1683 = vld [vmem:[%s12 + $0x38] sm:$0xff]
  %v1684 = vld [vmem:[%s13] sm:$0x1]
  %v1686 = vlaneseq
  %v1687 = vshrl.u32 %v1686, 7
  %v1688 = vsub.s32 0, %v1687
  %v1689 = vrot.slane %v1684, %v1688
  %v1692 = vsel %vm317, %v1660, 0
  %v1695 = vsel %vm317, %v1661, 0
  %v1698 = vsel %vm317, %v1662, 0
  %v1701 = vsel %vm317, %v1663, 0
  %v1704 = vsel %vm317, %v1664, 0
  %v1707 = vsel %vm317, %v1665, 0
  %v1710 = vsel %vm317, %v1666, 0
  %v1713 = vsel %vm317, %v1667, 0
  %v1716 = vsel %vm317, %v1668, 0
  %v1719 = vsel %vm317, %v1669, 0
  %v1722 = vsel %vm317, %v1670, 0
  %v1725 = vsel %vm317, %v1671, 0
  %v1728 = vsel %vm317, %v1672, 0
  %v1731 = vsel %vm317, %v1673, 0
  %v1734 = vsel %vm317, %v1674, 0
  %v1737 = vsel %vm317, %v1675, 0
  %1739 = vmatprep.subr.mxu0 0.0
  %1740 = vmatpush1.msra.mxu0 %v1676
  %1741 = vmatprep.subr.mxu0 0.0
  %1742 = vmatpush1.msra.mxu0 %v1677
  %1743 = vmatprep.subr.mxu0 0.0
  %1744 = vmatpush1.msra.mxu0 %v1678
  %1745 = vmatprep.subr.mxu0 0.0
  %1746 = vmatpush1.msra.mxu0 %v1679
  %1747 = vmatprep.subr.mxu0 0.0
  %1748 = vmatpush1.msra.mxu0 %v1680
  %1749 = vmatprep.subr.mxu0 0.0
  %1750 = vmatpush1.msra.mxu0 %v1681
  %1751 = vmatprep.subr.mxu0 0.0
  %1752 = vmatpush1.msra.mxu0 %v1682
  %1753 = vmatprep.subr.mxu0 0.0
  %1754 = vmatpush1.msra.mxu0 %v1683
  %1755 = vmatprep.subr.mxu0 0.0
  %1756 = vmatpush1.msra.mxu0 0.0
  %1757 = vmatprep.subr.mxu0 0.0
  %1758 = vmatpush1.msra.mxu0 0.0
  %1759 = vmatprep.subr.mxu0 0.0
  %1760 = vmatpush1.msra.mxu0 0.0
  %1761 = vmatprep.subr.mxu0 0.0
  %1762 = vmatpush1.msra.mxu0 0.0
  %1763 = vmatprep.subr.mxu0 0.0
  %1764 = vmatpush1.msra.mxu0 0.0
  %1765 = vmatprep.subr.mxu0 0.0
  %1766 = vmatpush1.msra.mxu0 0.0
  %1767 = vmatprep.subr.mxu0 0.0
  %1768 = vmatpush1.msra.mxu0 0.0
  %1769 = vmatprep.subr.mxu0 0.0
  %1770 = vmatpush1.msra.mxu0 0.0
  %1771 = vmatprep.subr.mxu0 0.0
  %1772 = vmatpush1.msra.mxu0 0.0
  %1773 = vmatprep.subr.mxu0 0.0
  %1774 = vmatpush1.msra.mxu0 0.0
  %1775 = vmatprep.subr.mxu0 0.0
  %1776 = vmatpush1.msra.mxu0 0.0
  %1777 = vmatprep.subr.mxu0 0.0
  %1778 = vmatpush1.msra.mxu0 0.0
  %1779 = vmatprep.subr.mxu0 0.0
  %1780 = vmatpush1.msra.mxu0 0.0
  %1781 = vmatprep.subr.mxu0 0.0
  %1782 = vmatpush1.msra.mxu0 0.0
  %1783 = vmatprep.subr.mxu0 0.0
  %1784 = vmatpush1.msra.mxu0 0.0
  %1785 = vmatprep.subr.mxu0 0.0
  %1786 = vmatpush1.msra.mxu0 0.0
  %1787 = vmatprep.subr.mxu0 0.0
  %1788 = vmatpush1.msra.mxu0 0.0
  %1789 = vmatprep.subr.mxu0 0.0
  %1790 = vmatpush1.msra.mxu0 0.0
  %1791 = vmatprep.subr.mxu0 0.0
  %1792 = vmatpush1.msra.mxu0 0.0
  %1793 = vmatprep.subr.mxu0 0.0
  %1794 = vmatpush1.msra.mxu0 0.0
  %1795 = vmatprep.subr.mxu0 0.0
  %1796 = vmatpush1.msra.mxu0 0.0
  %1797 = vmatprep.subr.mxu0 0.0
  %1798 = vmatpush1.msra.mxu0 0.0
  %1799 = vmatprep.subr.mxu0 0.0
  %1800 = vmatpush1.msra.mxu0 0.0
  %1801 = vmatprep.subr.mxu0 0.0
  %1802 = vmatpush1.msra.mxu0 0.0
  %1803 = vmatprep.mubr.f32.mxu0 0.0
  %1804 = vmatmul.mubr.f32.gmra.mrb[0].mxu0 %v1692
  %v1805 = vpop.f32.mrb[0].mxu0
  %v1806 = vadd.f32 %v1689, %v1805
  %v1807 = vpop.f32.mrb[0].mxu0
  %1808 = vmatprep.mubr.f32.mxu0 0.0
  %1809 = vmatmul.mubr.f32.gmra.mrb[0].mxu0 %v1695
  %v1810 = vpop.f32.mrb[0].mxu0
  %v1811 = vadd.f32 %v1689, %v1810
  %v1812 = vpop.f32.mrb[0].mxu0
  %1813 = vmatprep.mubr.f32.mxu0 0.0
  %1814 = vmatmul.mubr.f32.gmra.mrb[0].mxu0 %v1698
  %v1815 = vpop.f32.mrb[0].mxu0
  %v1816 = vadd.f32 %v1689, %v1815
  %v1817 = vpop.f32.mrb[0].mxu0
  %1818 = vmatprep.mubr.f32.mxu0 0.0
  %1819 = vmatmul.mubr.f32.gmra.mrb[0].mxu0 %v1701
  %v1820 = vpop.f32.mrb[0].mxu0
  %v1821 = vadd.f32 %v1689, %v1820
  %v1822 = vpop.f32.mrb[0].mxu0
  %1823 = vmatprep.mubr.f32.mxu0 0.0
  %1824 = vmatmul.mubr.f32.gmra.mrb[0].mxu0 %v1704
  %v1825 = vpop.f32.mrb[0].mxu0
  %v1826 = vadd.f32 %v1689, %v1825
  %v1827 = vpop.f32.mrb[0].mxu0
  %1828 = vmatprep.mubr.f32.mxu0 0.0
  %1829 = vmatmul.mubr.f32.gmra.mrb[0].mxu0 %v1707
  %v1830 = vpop.f32.mrb[0].mxu0
  %v1831 = vadd.f32 %v1689, %v1830
  %v1832 = vpop.f32.mrb[0].mxu0
  %1833 = vmatprep.mubr.f32.mxu0 0.0
  %1834 = vmatmul.mubr.f32.gmra.mrb[0].mxu0 %v1710
  %v1835 = vpop.f32.mrb[0].mxu0
  %v1836 = vadd.f32 %v1689, %v1835
  %v1837 = vpop.f32.mrb[0].mxu0
  %1838 = vmatprep.mubr.f32.mxu0 0.0
  %1839 = vmatmul.mubr.f32.gmra.mrb[0].mxu0 %v1713
  %v1840 = vpop.f32.mrb[0].mxu0
  %v1841 = vadd.f32 %v1689, %v1840
  %v1842 = vpop.f32.mrb[0].mxu0
  %1843 = vmatprep.mubr.f32.mxu0 0.0
  %1844 = vmatmul.mubr.f32.gmra.mrb[0].mxu0 %v1716
  %v1845 = vpop.f32.mrb[0].mxu0
  %v1846 = vadd.f32 %v1689, %v1845
  %v1847 = vpop.f32.mrb[0].mxu0
  %1848 = vmatprep.mubr.f32.mxu0 0.0
  %1849 = vmatmul.mubr.f32.gmra.mrb[0].mxu0 %v1719
  %v1850 = vpop.f32.mrb[0].mxu0
  %v1851 = vadd.f32 %v1689, %v1850
  %v1852 = vpop.f32.mrb[0].mxu0
  %1853 = vmatprep.mubr.f32.mxu0 0.0
  %1854 = vmatmul.mubr.f32.gmra.mrb[0].mxu0 %v1722
  %v1855 = vpop.f32.mrb[0].mxu0
  %v1856 = vadd.f32 %v1689, %v1855
  %v1857 = vpop.f32.mrb[0].mxu0
  %1858 = vmatprep.mubr.f32.mxu0 0.0
  %1859 = vmatmul.mubr.f32.gmra.mrb[0].mxu0 %v1725
  %v1860 = vpop.f32.mrb[0].mxu0
  %v1861 = vadd.f32 %v1689, %v1860
  %v1862 = vpop.f32.mrb[0].mxu0
  %1863 = vmatprep.mubr.f32.mxu0 0.0
  %1864 = vmatmul.mubr.f32.gmra.mrb[0].mxu0 %v1728
  %v1865 = vpop.f32.mrb[0].mxu0
  %v1866 = vadd.f32 %v1689, %v1865
  %v1867 = vpop.f32.mrb[0].mxu0
  %1868 = vmatprep.mubr.f32.mxu0 0.0
  %1869 = vmatmul.mubr.f32.gmra.mrb[0].mxu0 %v1731
  %v1870 = vpop.f32.mrb[0].mxu0
  %v1871 = vadd.f32 %v1689, %v1870
  %v1872 = vpop.f32.mrb[0].mxu0
  %1873 = vmatprep.mubr.f32.mxu0 0.0
  %1874 = vmatmul.mubr.f32.gmra.mrb[0].mxu0 %v1734
  %v1875 = vpop.f32.mrb[0].mxu0
  %v1876 = vadd.f32 %v1689, %v1875
  %v1877 = vpop.f32.mrb[0].mxu0
  %1878 = vmatprep.mubr.f32.mxu0 0.0
  %1879 = vmatmul.mubr.f32.gmra.mrb[0].mxu0 %v1737
  %v1880 = vpop.f32.mrb[0].mxu0
  %v1881 = vadd.f32 %v1689, %v1880
  %v1882 = vpop.f32.mrb[0].mxu0
  %1883 = vdwg.mxu0
  %1900 = vrot.lane.b32.xlu0 %v433, 32
  %v1901 = vpop.permute.xlu0 %1900
  %1902 = vrot.lane.b32.xlu0 %v438, 32
  %v1903 = vpop.permute.xlu0 %1902
  %1904 = vrot.lane.b32.xlu0 %v443, 32
  %v1905 = vpop.permute.xlu0 %1904
  %1906 = vrot.lane.b32.xlu0 %v448, 32
  %v1907 = vpop.permute.xlu0 %1906
  %1908 = vrot.lane.b32.xlu0 %v453, 32
  %v1909 = vpop.permute.xlu0 %1908
  %1910 = vrot.lane.b32.xlu0 %v458, 32
  %v1911 = vpop.permute.xlu0 %1910
  %1912 = vrot.lane.b32.xlu0 %v463, 32
  %v1913 = vpop.permute.xlu0 %1912
  %1914 = vrot.lane.b32.xlu0 %v468, 32
  %v1915 = vpop.permute.xlu0 %1914
  %1916 = vrot.lane.b32.xlu0 %v473, 32
  %v1917 = vpop.permute.xlu0 %1916
  %1918 = vrot.lane.b32.xlu0 %v478, 32
  %v1919 = vpop.permute.xlu0 %1918
  %1920 = vrot.lane.b32.xlu0 %v483, 32
  %v1921 = vpop.permute.xlu0 %1920
  %1922 = vrot.lane.b32.xlu0 %v488, 32
  %v1923 = vpop.permute.xlu0 %1922
  %1924 = vrot.lane.b32.xlu0 %v493, 32
  %v1925 = vpop.permute.xlu0 %1924
  %1926 = vrot.lane.b32.xlu0 %v498, 32
  %v1927 = vpop.permute.xlu0 %1926
  %1928 = vrot.lane.b32.xlu0 %v503, 32
  %v1929 = vpop.permute.xlu0 %1928
  %1930 = vrot.lane.b32.xlu0 %v508, 32
  %v1931 = vpop.permute.xlu0 %1930
  %1964 = vrot.lane.b32.xlu0 %v1342, 48
  %v1965 = vpop.permute.xlu0 %1964
  %1966 = vrot.lane.b32.xlu0 %v1347, 48
  %v1967 = vpop.permute.xlu0 %1966
  %1968 = vrot.lane.b32.xlu0 %v1352, 48
  %v1969 = vpop.permute.xlu0 %1968
  %1970 = vrot.lane.b32.xlu0 %v1357, 48
  %v1971 = vpop.permute.xlu0 %1970
  %1972 = vrot.lane.b32.xlu0 %v1362, 48
  %v1973 = vpop.permute.xlu0 %1972
  %1974 = vrot.lane.b32.xlu0 %v1367, 48
  %v1975 = vpop.permute.xlu0 %1974
  %1976 = vrot.lane.b32.xlu0 %v1372, 48
  %v1977 = vpop.permute.xlu0 %1976
  %1978 = vrot.lane.b32.xlu0 %v1377, 48
  %v1979 = vpop.permute.xlu0 %1978
  %1980 = vrot.lane.b32.xlu0 %v1382, 48
  %v1981 = vpop.permute.xlu0 %1980
  %1982 = vrot.lane.b32.xlu0 %v1387, 48
  %v1983 = vpop.permute.xlu0 %1982
  %1984 = vrot.lane.b32.xlu0 %v1392, 48
  %v1985 = vpop.permute.xlu0 %1984
  %1986 = vrot.lane.b32.xlu0 %v1397, 48
  %v1987 = vpop.permute.xlu0 %1986
  %1988 = vrot.lane.b32.xlu0 %v1402, 48
  %v1989 = vpop.permute.xlu0 %1988
  %1990 = vrot.lane.b32.xlu0 %v1407, 48
  %v1991 = vpop.permute.xlu0 %1990
  %1992 = vrot.lane.b32.xlu0 %v1412, 48
  %v1993 = vpop.permute.xlu0 %1992
  %1994 = vrot.lane.b32.xlu0 %v1417, 48
  %v1995 = vpop.permute.xlu0 %1994
  %2028 = vrot.lane.b32.xlu0 %v1806, 80
  %v2029 = vpop.permute.xlu0 %2028
  %2030 = vrot.lane.b32.xlu0 %v1811, 80
  %v2031 = vpop.permute.xlu0 %2030
  %2032 = vrot.lane.b32.xlu0 %v1816, 80
  %v2033 = vpop.permute.xlu0 %2032
  %2034 = vrot.lane.b32.xlu0 %v1821, 80
  %v2035 = vpop.permute.xlu0 %2034
  %2036 = vrot.lane.b32.xlu0 %v1826, 80
  %v2037 = vpop.permute.xlu0 %2036
  %2038 = vrot.lane.b32.xlu0 %v1831, 80
  %v2039 = vpop.permute.xlu0 %2038
  %2040 = vrot.lane.b32.xlu0 %v1836, 80
  %v2041 = vpop.permute.xlu0 %2040
  %2042 = vrot.lane.b32.xlu0 %v1841, 80
  %v2043 = vpop.permute.xlu0 %2042
  %2044 = vrot.lane.b32.xlu0 %v1846, 80
  %v2045 = vpop.permute.xlu0 %2044
  %2046 = vrot.lane.b32.xlu0 %v1851, 80
  %v2047 = vpop.permute.xlu0 %2046
  %2048 = vrot.lane.b32.xlu0 %v1856, 80
  %v2049 = vpop.permute.xlu0 %2048
  %2050 = vrot.lane.b32.xlu0 %v1861, 80
  %v2051 = vpop.permute.xlu0 %2050
  %2052 = vrot.lane.b32.xlu0 %v1866, 80
  %v2053 = vpop.permute.xlu0 %2052
  %2054 = vrot.lane.b32.xlu0 %v1871, 80
  %v2055 = vpop.permute.xlu0 %2054
  %2056 = vrot.lane.b32.xlu0 %v1876, 80
  %v2057 = vpop.permute.xlu0 %2056
  %2058 = vrot.lane.b32.xlu0 %v1881, 80
  %v2059 = vpop.permute.xlu0 %2058
  %vm2076 = vcmask 261120
  %v2077 = vsel %vm2076, %v1422, %v1901
  %v2078 = vsel %vm2076, %v1427, %v1903
  %v2079 = vsel %vm2076, %v1432, %v1905
  %v2080 = vsel %vm2076, %v1437, %v1907
  %v2081 = vsel %vm2076, %v1442, %v1909
  %v2082 = vsel %vm2076, %v1447, %v1911
  %v2083 = vsel %vm2076, %v1452, %v1913
  %v2084 = vsel %vm2076, %v1457, %v1915
  %v2085 = vsel %vm2076, %v1462, %v1917
  %v2086 = vsel %vm2076, %v1467, %v1919
  %v2087 = vsel %vm2076, %v1472, %v1921
  %v2088 = vsel %vm2076, %v1477, %v1923
  %v2089 = vsel %vm2076, %v1482, %v1925
  %v2090 = vsel %vm2076, %v1487, %v1927
  %v2091 = vsel %vm2076, %v1492, %v1929
  %v2092 = vsel %vm2076, %v1497, %v1931
  %vm2093 = vcmask 326656
  %v2094 = vsel %vm2093, %v2077, %v1901
  %v2095 = vsel %vm2093, %v2078, %v1903
  %v2096 = vsel %vm2093, %v2079, %v1905
  %v2097 = vsel %vm2093, %v2080, %v1907
  %v2098 = vsel %vm2093, %v2081, %v1909
  %v2099 = vsel %vm2093, %v2082, %v1911
  %v2100 = vsel %vm2093, %v2083, %v1913
  %v2101 = vsel %vm2093, %v2084, %v1915
  %v2102 = vsel %vm2093, %v2085, %v1917
  %v2103 = vsel %vm2093, %v2086, %v1919
  %v2104 = vsel %vm2093, %v2087, %v1921
  %v2105 = vsel %vm2093, %v2088, %v1923
  %v2106 = vsel %vm2093, %v2089, %v1925
  %v2107 = vsel %vm2093, %v2090, %v1927
  %v2108 = vsel %vm2093, %v2091, %v1929
  %v2109 = vsel %vm2093, %v2092, %v1931
  %v2110 = vsel %vm92, %v2094, %v1965
  %v2111 = vsel %vm92, %v2095, %v1967
  %v2112 = vsel %vm92, %v2096, %v1969
  %v2113 = vsel %vm92, %v2097, %v1971
  %v2114 = vsel %vm92, %v2098, %v1973
  %v2115 = vsel %vm92, %v2099, %v1975
  %v2116 = vsel %vm92, %v2100, %v1977
  %v2117 = vsel %vm92, %v2101, %v1979
  %v2118 = vsel %vm92, %v2102, %v1981
  %v2119 = vsel %vm92, %v2103, %v1983
  %v2120 = vsel %vm92, %v2104, %v1985
  %v2121 = vsel %vm92, %v2105, %v1987
  %v2122 = vsel %vm92, %v2106, %v1989
  %v2123 = vsel %vm92, %v2107, %v1991
  %v2124 = vsel %vm92, %v2108, %v1993
  %v2125 = vsel %vm92, %v2109, %v1995
  %vm2126 = vcmask 654336
  %v2127 = vsel %vm2126, %v2110, %v2029
  %v2128 = vsel %vm2126, %v2111, %v2031
  %v2129 = vsel %vm2126, %v2112, %v2033
  %v2130 = vsel %vm2126, %v2113, %v2035
  %v2131 = vsel %vm2126, %v2114, %v2037
  %v2132 = vsel %vm2126, %v2115, %v2039
  %v2133 = vsel %vm2126, %v2116, %v2041
  %v2134 = vsel %vm2126, %v2117, %v2043
  %v2135 = vsel %vm2126, %v2118, %v2045
  %v2136 = vsel %vm2126, %v2119, %v2047
  %v2137 = vsel %vm2126, %v2120, %v2049
  %v2138 = vsel %vm2126, %v2121, %v2051
  %v2139 = vsel %vm2126, %v2122, %v2053
  %v2140 = vsel %vm2126, %v2123, %v2055
  %v2141 = vsel %vm2126, %v2124, %v2057
  %v2142 = vsel %vm2126, %v2125, %v2059
  %vm2143 = vcmask 785408
  %v2144 = vsel %vm2143, %v2127, 0.0
  %v2145 = vsel %vm2143, %v2128, 0.0
  %v2146 = vsel %vm2143, %v2129, 0.0
  %v2147 = vsel %vm2143, %v2130, 0.0
  %v2148 = vsel %vm2143, %v2131, 0.0
  %v2149 = vsel %vm2143, %v2132, 0.0
  %v2150 = vsel %vm2143, %v2133, 0.0
  %v2151 = vsel %vm2143, %v2134, 0.0
  %v2152 = vsel %vm2143, %v2135, 0.0
  %v2153 = vsel %vm2143, %v2136, 0.0
  %v2154 = vsel %vm2143, %v2137, 0.0
  %v2155 = vsel %vm2143, %v2138, 0.0
  %v2156 = vsel %vm2143, %v2139, 0.0
  %v2157 = vsel %vm2143, %v2140, 0.0
  %v2158 = vsel %vm2143, %v2141, 0.0
  %v2159 = vsel %vm2143, %v2142, 0.0
  %2160 = vst [vmem:[%s14] sm:$0xff] %v2144
  %2161 = vst [vmem:[%s14 + $0x8] sm:$0xff] %v2145
  %2162 = vst [vmem:[%s14 + $0x10] sm:$0xff] %v2146
  %2163 = vst [vmem:[%s14 + $0x18] sm:$0xff] %v2147
  %2164 = vst [vmem:[%s14 + $0x20] sm:$0xff] %v2148
  %2165 = vst [vmem:[%s14 + $0x28] sm:$0xff] %v2149
  %2166 = vst [vmem:[%s14 + $0x30] sm:$0xff] %v2150
  %2167 = vst [vmem:[%s14 + $0x38] sm:$0xff] %v2151
  %2168 = vst [vmem:[%s14 + $0x40] sm:$0xff] %v2152
  %2169 = vst [vmem:[%s14 + $0x48] sm:$0xff] %v2153
  %2170 = vst [vmem:[%s14 + $0x50] sm:$0xff] %v2154
  %2171 = vst [vmem:[%s14 + $0x58] sm:$0xff] %v2155
  %2172 = vst [vmem:[%s14 + $0x60] sm:$0xff] %v2156
  %2173 = vst [vmem:[%s14 + $0x68] sm:$0xff] %v2157
  %2174 = vst [vmem:[%s14 + $0x70] sm:$0xff] %v2158
  %2175 = vst [vmem:[%s14 + $0x78] sm:$0xff] %v2159
  // Predicated region
  $region58: #{cvae_hybrid_forward.1} parent=0 // pred_check
    _
  $region59: #{cvae_hybrid_forward.1} parent=0 // pred_check_branch
    %2177 = sbr.rel (0) target = $region61
  $region60: #{cvae_hybrid_forward.1} parent=0 // pred_region
    _
  $region61: #{cvae_hybrid_forward.1} parent=0 // pred_fallthru
    _
  // Predicated region
  $region62: #{cvae_hybrid_forward.1} parent=0 // pred_check
    _
  $region63: #{cvae_hybrid_forward.1} parent=0 // pred_check_branch
    %2179 = sbr.rel (0) target = $region65
  $region64: #{cvae_hybrid_forward.1} parent=0 // pred_region
    _
  $region65: #{cvae_hybrid_forward.1} parent=0 // pred_fallthru
    _

</llo_original>
